<compile_context>
chip_gen: v7x
topology: tpu7x:2x2x1
jax: 0.10.0
libtpu: 0.0.40
codegen_flags: <defaults>
</compile_context>

<pallas_src>
import jax
import jax.numpy as jnp
from jax.experimental import pallas as pl
from jax.experimental.pallas import tpu as pltpu


# ----------------------------- Pallas kernel -------------------------------

def _goal_encoder_kernel(x_ref, effb3_ref,
                         w1_ref, b1_ref, w2_ref, b2_ref,
                         w3_ref, w4_ref, b4_ref,
                         o_ref):
    # x_ref:     (tb, C_in, HW)  bf16   channel-major pixels for tb batch elems
    # effb3_ref: (tb, CH0, 1)    f32    per-batch effective bias for layer 3
    # wN_ref:    (C_out, C_in)   bf16   transposed conv1x1 weights
    # bN_ref:    (C_out, 1)      f32    column biases
    # o_ref:     (tb, CH1, HW)   f32    channel-major output
    tb = x_ref.shape[0]
    w1 = w1_ref[...]
    w2 = w2_ref[...]
    w3 = w3_ref[...]
    w4 = w4_ref[...]
    b1 = b1_ref[...]
    b2 = b2_ref[...]
    b4 = b4_ref[...]

    for b in range(tb):                              # static unroll (tb small)
        x = x_ref[b]                                 # (C_in, HW) bf16

        # resnet_compressor: conv1x1 -> ReLU -> conv1x1 -> ReLU
        h = jnp.dot(w1, x, preferred_element_type=jnp.float32) + b1
        h = jnp.maximum(h, 0.0).astype(jnp.bfloat16)         # (RH0, HW)
        h = jnp.dot(w2, h, preferred_element_type=jnp.float32) + b2
        h = jnp.maximum(h, 0.0).astype(jnp.bfloat16)         # (RH1, HW)

        # target_obs_combiner layer 1: the concat with the broadcast goal
        # embedding is folded into a per-batch effective bias (eff_b3).
        y = jnp.dot(w3, h, preferred_element_type=jnp.float32) + effb3_ref[b]
        y = jnp.maximum(y, 0.0).astype(jnp.bfloat16)         # (CH0, HW)

        # target_obs_combiner layer 2 (no final ReLU)
        y = jnp.dot(w4, y, preferred_element_type=jnp.float32) + b4
        o_ref[b] = y                                         # (CH1, HW) f32


def _run_goal_encoder(x_cm, effb3, w1t, b1c, w2t, b2c, w3ht, w4t, b4c):
    """x_cm: (B, C_in, HW) bf16, effb3: (B, CH0, 1) f32 -> (B, CH1, HW) f32."""
    B, C_in, HW = x_cm.shape
    CH0 = w3ht.shape[0]
    CH1 = w4t.shape[0]

    # 2 batch-tiles when possible: fewer grid steps than grid=(B,), and the
    # leading "parallel" axis lets v7x shard across its two TensorCores.
    nt = 2 if (B % 2 == 0 and B >= 2) else 1
    tb = B // nt

    def full_spec(arr):
        nd = arr.ndim
        return pl.BlockSpec(arr.shape, lambda i, nd=nd: (0,) * nd)

    grid_spec = pltpu.PrefetchScalarGridSpec(
        num_scalar_prefetch=0,
        grid=(nt,),
        in_specs=[
            pl.BlockSpec((tb, C_in, HW), lambda i: (i, 0, 0)),   # x (chan-major)
            pl.BlockSpec((tb, CH0, 1), lambda i: (i, 0, 0)),     # eff_b3
            full_spec(w1t), full_spec(b1c),
            full_spec(w2t), full_spec(b2c),
            full_spec(w3ht),
            full_spec(w4t), full_spec(b4c),
        ],
        out_specs=pl.BlockSpec((tb, CH1, HW), lambda i: (i, 0, 0)),
    )

    return pl.pallas_call(
        _goal_encoder_kernel,
        out_shape=jax.ShapeDtypeStruct((B, CH1, HW), jnp.float32),
        grid_spec=grid_spec,
        compiler_params=pltpu.CompilerParams(
            dimension_semantics=("parallel",)),
    )(x_cm, effb3, w1t, b1c, w2t, b2c, w3ht, w4t, b4c)


# --------------------------- Module-level wrapper ---------------------------

def resnet_tensor_goal_encoder_forward(resnet_obs, goal_obs, params):
    """Pallas implementation of ResnetTensorGoalEncoder.forward
    (non-blind, Discrete goal space, use_agent == False).

    resnet_obs: (nstep, nsampler, C, H, W) float32   (NCHW per sample)
    goal_obs:   (nstep, nsampler, 1)       int32     (discrete goal index)
    returns:    (nstep, nsampler, CH1 * H * W) float32
    """
    nstep, nsampler = resnet_obs.shape[:2]
    C, H, W = resnet_obs.shape[-3:]
    B = nstep * nsampler

    # adapt_input.  NCHW -> (B, C, H*W) is a pure reshape: no transpose, no
    # extra HBM round trip.
    x_cm = resnet_obs.reshape(B, C, H * W).astype(jnp.bfloat16)
    goal = goal_obs.reshape(B, goal_obs.shape[-1]).astype(jnp.int32)

    # embed_goal (nn.Embedding lookup) -- tiny gather in XLA glue.
    # NOTE: only goal[..., 0] is embedded (matches the torch Discrete path).
    g_emb = params["emb"][goal[:, 0]]                              # (B, GE)

    # Split w3 into feature / goal parts and fold the goal contribution into a
    # per-batch effective bias:  cat([h, g]) @ w3 + b3 == h @ w3_h + (g @ w3_g + b3)
    RH1 = params["w2"].shape[-1]
    CH0 = params["w3"].shape[-1]
    w3_h = params["w3"][:RH1]                                      # (RH1, CH0)
    w3_g = params["w3"][RH1:]                                      # (GE,  CH0)
    effb3 = (g_emb @ w3_g + params["b3"]).astype(jnp.float32)      # (B, CH0)
    effb3 = effb3.reshape(B, CH0, 1)

    # Transposed bf16 weights for channel-major matmuls; f32 column biases.
    w1t = params["w1"].T.astype(jnp.bfloat16)            # (RH0, C_in)
    w2t = params["w2"].T.astype(jnp.bfloat16)            # (RH1, RH0)
    w3ht = w3_h.T.astype(jnp.bfloat16)                   # (CH0, RH1)
    w4t = params["w4"].T.astype(jnp.bfloat16)            # (CH1, CH0)
    b1c = params["b1"].reshape(-1, 1).astype(jnp.float32)
    b2c = params["b2"].reshape(-1, 1).astype(jnp.float32)
    b4c = params["b4"].reshape(-1, 1).astype(jnp.float32)

    y = _run_goal_encoder(x_cm, effb3, w1t, b1c, w2t, b2c, w3ht, w4t, b4c)

    # y is already channel-major (B, CH1, HW): flattening matches torch's
    # x.reshape(x.size(0), -1) exactly.  adapt_output (use_agent == False).
    return y.reshape(nstep, nsampler, -1)


# ------------------------------ Pure-JAX reference --------------------------

def _reference_forward(resnet_obs, goal_obs, params):
    nstep, nsampler = resnet_obs.shape[:2]
    C, H, W = resnet_obs.shape[-3:]
    B = nstep * nsampler
    x = resnet_obs.reshape(B, C, H, W)
    goal = goal_obs.reshape(B, -1).astype(jnp.int32)
    g_emb = params["emb"][goal[:, 0]]

    def conv1x1(t, w, b):  # w: (Cin, Cout), b: (1, Cout)
        return jnp.einsum("bchw,co->bohw", t, w) + b.reshape(1, -1, 1, 1)

    h = jax.nn.relu(conv1x1(x, params["w1"], params["b1"]))
    h = jax.nn.relu(conv1x1(h, params["w2"], params["b2"]))
    gmap = jnp.broadcast_to(g_emb[:, :, None, None],
                            (B, g_emb.shape[1], H, W))
    cat = jnp.concatenate([h, gmap], axis=1)
    y = jax.nn.relu(conv1x1(cat, params["w3"], params["b3"]))
    y = conv1x1(y, params["w4"], params["b4"])
    return y.reshape(B, -1).reshape(nstep, nsampler, -1)


# ----------------------------------- main ------------------------------------

if __name__ == "__main__":
    # Module hyperparameters (defaults of ResnetTensorGoalEncoder).
    GOAL_EMBED_DIMS = 32
    RESNET_HID = (128, 32)
    COMBINE_HID = (128, 32)

    # Small synthetic observation space (H*W = 256 -> lane-dense tiles).
    NUM_GOAL_CLASSES = 10       # Discrete goal space
    C_IN, H, W = 16, 16, 16     # resnet_tensor_shape
    NSTEP, NSAMPLER = 2, 3

    key = jax.random.PRNGKey(0)
    keys = jax.random.split(key, 12)

    params = {
        # nn.Embedding(NUM_GOAL_CLASSES, GOAL_EMBED_DIMS)
        "emb": jax.random.normal(keys[0], (NUM_GOAL_CLASSES, GOAL_EMBED_DIMS),
                                 jnp.float32) * 0.1,
        # resnet_compressor: Conv2d(C_IN, 128, 1), Conv2d(128, 32, 1)
        "w1": jax.random.normal(keys[1], (C_IN, RESNET_HID[0]), jnp.float32) * 0.1,
        "b1": jax.random.normal(keys[2], (1, RESNET_HID[0]), jnp.float32) * 0.1,
        "w2": jax.random.normal(keys[3], (RESNET_HID[0], RESNET_HID[1]),
                                jnp.float32) * 0.1,
        "b2": jax.random.normal(keys[4], (1, RESNET_HID[1]), jnp.float32) * 0.1,
        # target_obs_combiner: Conv2d(32 + 32, 128, 1), Conv2d(128, 32, 1)
        "w3": jax.random.normal(keys[5],
                                (RESNET_HID[1] + GOAL_EMBED_DIMS, COMBINE_HID[0]),
                                jnp.float32) * 0.1,
        "b3": jax.random.normal(keys[6], (1, COMBINE_HID[0]), jnp.float32) * 0.1,
        "w4": jax.random.normal(keys[7], (COMBINE_HID[0], COMBINE_HID[1]),
                                jnp.float32) * 0.1,
        "b4": jax.random.normal(keys[8], (1, COMBINE_HID[1]), jnp.float32) * 0.1,
    }

    resnet_obs = jax.random.normal(keys[9], (NSTEP, NSAMPLER, C_IN, H, W),
                                   jnp.float32)
    goal_obs = jax.random.randint(keys[10], (NSTEP, NSAMPLER, 1),
                                  0, NUM_GOAL_CLASSES, jnp.int32)

    forward = jax.jit(resnet_tensor_goal_encoder_forward)
    out = forward(resnet_obs, goal_obs, params)
    out = jax.block_until_ready(out)

    ref = _reference_forward(resnet_obs, goal_obs, params)
    ref = jax.block_until_ready(ref)

    assert out.shape == (NSTEP, NSAMPLER, COMBINE_HID[1] * H * W), out.shape
    # Kernel runs bf16 activations/weights with f32 accumulation -> looser
    # tolerance vs the pure-f32 reference (expected error ~1e-2).
    assert jnp.allclose(out, ref, atol=5e-2, rtol=5e-2), "mismatch vs reference"

    print("KERNEL_OK")
</pallas_src>

<mosaic_0001>
module attributes {stable_mosaic.version = 11 : i64} {
  func.func @_goal_encoder_kernel(%arg0: i32, %arg1: memref<3x16x256xbf16, #tpu.memory_space<vmem>>, %arg2: memref<3x128x1xf32, #tpu.memory_space<vmem>>, %arg3: memref<128x16xbf16, #tpu.memory_space<vmem>>, %arg4: memref<128x1xf32, #tpu.memory_space<vmem>>, %arg5: memref<32x128xbf16, #tpu.memory_space<vmem>>, %arg6: memref<32x1xf32, #tpu.memory_space<vmem>>, %arg7: memref<128x32xbf16, #tpu.memory_space<vmem>>, %arg8: memref<32x128xbf16, #tpu.memory_space<vmem>>, %arg9: memref<32x1xf32, #tpu.memory_space<vmem>>, %arg10: memref<3x32x256xf32, #tpu.memory_space<vmem>>) attributes {dimension_semantics = [#tpu.dimension_semantics<parallel>], iteration_bounds = array<i64: 2>, scalar_prefetch = 0 : i64, scratch_operands = 0 : i64, tpu.core_type = #tpu.core_type<tc>, window_params = [{transform_indices = @transform_0, window_bounds = array<i64: 3, 16, 256>}, {transform_indices = @transform_1, window_bounds = array<i64: 3, 128, 1>}, {pipeline_mode = #tpu.pipeline_mode<synchronous>, transform_indices = @transform_2, window_bounds = array<i64: 128, 16>}, {pipeline_mode = #tpu.pipeline_mode<synchronous>, transform_indices = @transform_3, window_bounds = array<i64: 128, 1>}, {pipeline_mode = #tpu.pipeline_mode<synchronous>, transform_indices = @transform_4, window_bounds = array<i64: 32, 128>}, {pipeline_mode = #tpu.pipeline_mode<synchronous>, transform_indices = @transform_5, window_bounds = array<i64: 32, 1>}, {pipeline_mode = #tpu.pipeline_mode<synchronous>, transform_indices = @transform_6, window_bounds = array<i64: 128, 32>}, {pipeline_mode = #tpu.pipeline_mode<synchronous>, transform_indices = @transform_7, window_bounds = array<i64: 32, 128>}, {pipeline_mode = #tpu.pipeline_mode<synchronous>, transform_indices = @transform_8, window_bounds = array<i64: 32, 1>}, {transform_indices = @transform_9, window_bounds = array<i64: 3, 32, 256>}]} {
    %c0 = arith.constant 0 : index
    %c0_0 = arith.constant 0 : index
    %0 = vector.load %arg3[%c0, %c0_0] : memref<128x16xbf16, #tpu.memory_space<vmem>>, vector<128x16xbf16>
    %c0_1 = arith.constant 0 : index
    %c0_2 = arith.constant 0 : index
    %1 = vector.load %arg5[%c0_1, %c0_2] : memref<32x128xbf16, #tpu.memory_space<vmem>>, vector<32x128xbf16>
    %c0_3 = arith.constant 0 : index
    %c0_4 = arith.constant 0 : index
    %2 = vector.load %arg7[%c0_3, %c0_4] : memref<128x32xbf16, #tpu.memory_space<vmem>>, vector<128x32xbf16>
    %c0_5 = arith.constant 0 : index
    %c0_6 = arith.constant 0 : index
    %3 = vector.load %arg8[%c0_5, %c0_6] : memref<32x128xbf16, #tpu.memory_space<vmem>>, vector<32x128xbf16>
    %c0_7 = arith.constant 0 : index
    %c0_8 = arith.constant 0 : index
    %4 = vector.load %arg4[%c0_7, %c0_8] : memref<128x1xf32, #tpu.memory_space<vmem>>, vector<128x1xf32>
    %c0_9 = arith.constant 0 : index
    %c0_10 = arith.constant 0 : index
    %5 = vector.load %arg6[%c0_9, %c0_10] : memref<32x1xf32, #tpu.memory_space<vmem>>, vector<32x1xf32>
    %c0_11 = arith.constant 0 : index
    %c0_12 = arith.constant 0 : index
    %6 = vector.load %arg9[%c0_11, %c0_12] : memref<32x1xf32, #tpu.memory_space<vmem>>, vector<32x1xf32>
    %c0_13 = arith.constant 0 : index
    %c0_14 = arith.constant 0 : index
    %c0_15 = arith.constant 0 : index
    %7 = vector.load %arg1[%c0_13, %c0_14, %c0_15] : memref<3x16x256xbf16, #tpu.memory_space<vmem>>, vector<1x16x256xbf16>
    %8 = vector.shape_cast %7 : vector<1x16x256xbf16> to vector<16x256xbf16>
    %cst = arith.constant dense<0.000000e+00> : vector<128x256xf32>
    %9 = tpu.matmul %0, %8, %cst {dimension_numbers = #tpu.dot_dimension_numbers<[1], [0], [0], [1], [0, 0, 1, 1], [], []>} : vector<128x16xbf16>, vector<16x256xbf16>, vector<128x256xf32> -> vector<128x256xf32>
    %10 = vector.broadcast %4 : vector<128x1xf32> to vector<128x256xf32>
    %11 = arith.addf %9, %10 : vector<128x256xf32>
    %cst_16 = arith.constant 0.000000e+00 : f32
    %12 = vector.broadcast %cst_16 : f32 to vector<128x256xf32>
    %13 = arith.maximumf %11, %12 : vector<128x256xf32>
    %14 = arith.truncf %13 : vector<128x256xf32> to vector<128x256xbf16>
    %cst_17 = arith.constant dense<0.000000e+00> : vector<32x256xf32>
    %15 = tpu.matmul %1, %14, %cst_17 {dimension_numbers = #tpu.dot_dimension_numbers<[1], [0], [0], [1], [0, 0, 1, 1], [], []>} : vector<32x128xbf16>, vector<128x256xbf16>, vector<32x256xf32> -> vector<32x256xf32>
    %16 = vector.broadcast %5 : vector<32x1xf32> to vector<32x256xf32>
    %17 = arith.addf %15, %16 : vector<32x256xf32>
    %cst_18 = arith.constant 0.000000e+00 : f32
    %18 = vector.broadcast %cst_18 : f32 to vector<32x256xf32>
    %19 = arith.maximumf %17, %18 : vector<32x256xf32>
    %20 = arith.truncf %19 : vector<32x256xf32> to vector<32x256xbf16>
    %cst_19 = arith.constant dense<0.000000e+00> : vector<128x256xf32>
    %21 = tpu.matmul %2, %20, %cst_19 {dimension_numbers = #tpu.dot_dimension_numbers<[1], [0], [0], [1], [0, 0, 1, 1], [], []>} : vector<128x32xbf16>, vector<32x256xbf16>, vector<128x256xf32> -> vector<128x256xf32>
    %c0_20 = arith.constant 0 : index
    %c0_21 = arith.constant 0 : index
    %c0_22 = arith.constant 0 : index
    %22 = vector.load %arg2[%c0_20, %c0_21, %c0_22] : memref<3x128x1xf32, #tpu.memory_space<vmem>>, vector<1x128x1xf32>
    %23 = vector.shape_cast %22 : vector<1x128x1xf32> to vector<128x1xf32>
    %24 = vector.broadcast %23 : vector<128x1xf32> to vector<128x256xf32>
    %25 = arith.addf %21, %24 : vector<128x256xf32>
    %cst_23 = arith.constant 0.000000e+00 : f32
    %26 = vector.broadcast %cst_23 : f32 to vector<128x256xf32>
    %27 = arith.maximumf %25, %26 : vector<128x256xf32>
    %28 = arith.truncf %27 : vector<128x256xf32> to vector<128x256xbf16>
    %cst_24 = arith.constant dense<0.000000e+00> : vector<32x256xf32>
    %29 = tpu.matmul %3, %28, %cst_24 {dimension_numbers = #tpu.dot_dimension_numbers<[1], [0], [0], [1], [0, 0, 1, 1], [], []>} : vector<32x128xbf16>, vector<128x256xbf16>, vector<32x256xf32> -> vector<32x256xf32>
    %30 = vector.broadcast %6 : vector<32x1xf32> to vector<32x256xf32>
    %31 = arith.addf %29, %30 : vector<32x256xf32>
    %c0_25 = arith.constant 0 : index
    %c0_26 = arith.constant 0 : index
    %c0_27 = arith.constant 0 : index
    %32 = vector.load %arg10[%c0_25, %c0_26, %c0_27] : memref<3x32x256xf32, #tpu.memory_space<vmem>>, vector<1x32x256xf32>
    %33 = vector.shape_cast %32 : vector<1x32x256xf32> to vector<32x256xf32>
    %34 = vector.shape_cast %31 : vector<32x256xf32> to vector<1x32x256xf32>
    tpu.vector_store %arg10[%c0_25, %c0_26, %c0_27], %34 {strides = array<i32>} : memref<3x32x256xf32, #tpu.memory_space<vmem>>, vector<1x32x256xf32>,
    %c1 = arith.constant 1 : index
    %c0_28 = arith.constant 0 : index
    %c0_29 = arith.constant 0 : index
    %35 = vector.load %arg1[%c1, %c0_28, %c0_29] : memref<3x16x256xbf16, #tpu.memory_space<vmem>>, vector<1x16x256xbf16>
    %36 = vector.shape_cast %35 : vector<1x16x256xbf16> to vector<16x256xbf16>
    %cst_30 = arith.constant dense<0.000000e+00> : vector<128x256xf32>
    %37 = tpu.matmul %0, %36, %cst_30 {dimension_numbers = #tpu.dot_dimension_numbers<[1], [0], [0], [1], [0, 0, 1, 1], [], []>} : vector<128x16xbf16>, vector<16x256xbf16>, vector<128x256xf32> -> vector<128x256xf32>
    %38 = vector.broadcast %4 : vector<128x1xf32> to vector<128x256xf32>
    %39 = arith.addf %37, %38 : vector<128x256xf32>
    %cst_31 = arith.constant 0.000000e+00 : f32
    %40 = vector.broadcast %cst_31 : f32 to vector<128x256xf32>
    %41 = arith.maximumf %39, %40 : vector<128x256xf32>
    %42 = arith.truncf %41 : vector<128x256xf32> to vector<128x256xbf16>
    %cst_32 = arith.constant dense<0.000000e+00> : vector<32x256xf32>
    %43 = tpu.matmul %1, %42, %cst_32 {dimension_numbers = #tpu.dot_dimension_numbers<[1], [0], [0], [1], [0, 0, 1, 1], [], []>} : vector<32x128xbf16>, vector<128x256xbf16>, vector<32x256xf32> -> vector<32x256xf32>
    %44 = vector.broadcast %5 : vector<32x1xf32> to vector<32x256xf32>
    %45 = arith.addf %43, %44 : vector<32x256xf32>
    %cst_33 = arith.constant 0.000000e+00 : f32
    %46 = vector.broadcast %cst_33 : f32 to vector<32x256xf32>
    %47 = arith.maximumf %45, %46 : vector<32x256xf32>
    %48 = arith.truncf %47 : vector<32x256xf32> to vector<32x256xbf16>
    %cst_34 = arith.constant dense<0.000000e+00> : vector<128x256xf32>
    %49 = tpu.matmul %2, %48, %cst_34 {dimension_numbers = #tpu.dot_dimension_numbers<[1], [0], [0], [1], [0, 0, 1, 1], [], []>} : vector<128x32xbf16>, vector<32x256xbf16>, vector<128x256xf32> -> vector<128x256xf32>
    %c1_35 = arith.constant 1 : index
    %c0_36 = arith.constant 0 : index
    %c0_37 = arith.constant 0 : index
    %50 = vector.load %arg2[%c1_35, %c0_36, %c0_37] : memref<3x128x1xf32, #tpu.memory_space<vmem>>, vector<1x128x1xf32>
    %51 = vector.shape_cast %50 : vector<1x128x1xf32> to vector<128x1xf32>
    %52 = vector.broadcast %51 : vector<128x1xf32> to vector<128x256xf32>
    %53 = arith.addf %49, %52 : vector<128x256xf32>
    %cst_38 = arith.constant 0.000000e+00 : f32
    %54 = vector.broadcast %cst_38 : f32 to vector<128x256xf32>
    %55 = arith.maximumf %53, %54 : vector<128x256xf32>
    %56 = arith.truncf %55 : vector<128x256xf32> to vector<128x256xbf16>
    %cst_39 = arith.constant dense<0.000000e+00> : vector<32x256xf32>
    %57 = tpu.matmul %3, %56, %cst_39 {dimension_numbers = #tpu.dot_dimension_numbers<[1], [0], [0], [1], [0, 0, 1, 1], [], []>} : vector<32x128xbf16>, vector<128x256xbf16>, vector<32x256xf32> -> vector<32x256xf32>
    %58 = vector.broadcast %6 : vector<32x1xf32> to vector<32x256xf32>
    %59 = arith.addf %57, %58 : vector<32x256xf32>
    %c1_40 = arith.constant 1 : index
    %c0_41 = arith.constant 0 : index
    %c0_42 = arith.constant 0 : index
    %60 = vector.load %arg10[%c1_40, %c0_41, %c0_42] : memref<3x32x256xf32, #tpu.memory_space<vmem>>, vector<1x32x256xf32>
    %61 = vector.shape_cast %60 : vector<1x32x256xf32> to vector<32x256xf32>
    %62 = vector.shape_cast %59 : vector<32x256xf32> to vector<1x32x256xf32>
    tpu.vector_store %arg10[%c1_40, %c0_41, %c0_42], %62 {strides = array<i32>} : memref<3x32x256xf32, #tpu.memory_space<vmem>>, vector<1x32x256xf32>,
    %c2 = arith.constant 2 : index
    %c0_43 = arith.constant 0 : index
    %c0_44 = arith.constant 0 : index
    %63 = vector.load %arg1[%c2, %c0_43, %c0_44] : memref<3x16x256xbf16, #tpu.memory_space<vmem>>, vector<1x16x256xbf16>
    %64 = vector.shape_cast %63 : vector<1x16x256xbf16> to vector<16x256xbf16>
    %cst_45 = arith.constant dense<0.000000e+00> : vector<128x256xf32>
    %65 = tpu.matmul %0, %64, %cst_45 {dimension_numbers = #tpu.dot_dimension_numbers<[1], [0], [0], [1], [0, 0, 1, 1], [], []>} : vector<128x16xbf16>, vector<16x256xbf16>, vector<128x256xf32> -> vector<128x256xf32>
    %66 = vector.broadcast %4 : vector<128x1xf32> to vector<128x256xf32>
    %67 = arith.addf %65, %66 : vector<128x256xf32>
    %cst_46 = arith.constant 0.000000e+00 : f32
    %68 = vector.broadcast %cst_46 : f32 to vector<128x256xf32>
    %69 = arith.maximumf %67, %68 : vector<128x256xf32>
    %70 = arith.truncf %69 : vector<128x256xf32> to vector<128x256xbf16>
    %cst_47 = arith.constant dense<0.000000e+00> : vector<32x256xf32>
    %71 = tpu.matmul %1, %70, %cst_47 {dimension_numbers = #tpu.dot_dimension_numbers<[1], [0], [0], [1], [0, 0, 1, 1], [], []>} : vector<32x128xbf16>, vector<128x256xbf16>, vector<32x256xf32> -> vector<32x256xf32>
    %72 = vector.broadcast %5 : vector<32x1xf32> to vector<32x256xf32>
    %73 = arith.addf %71, %72 : vector<32x256xf32>
    %cst_48 = arith.constant 0.000000e+00 : f32
    %74 = vector.broadcast %cst_48 : f32 to vector<32x256xf32>
    %75 = arith.maximumf %73, %74 : vector<32x256xf32>
    %76 = arith.truncf %75 : vector<32x256xf32> to vector<32x256xbf16>
    %cst_49 = arith.constant dense<0.000000e+00> : vector<128x256xf32>
    %77 = tpu.matmul %2, %76, %cst_49 {dimension_numbers = #tpu.dot_dimension_numbers<[1], [0], [0], [1], [0, 0, 1, 1], [], []>} : vector<128x32xbf16>, vector<32x256xbf16>, vector<128x256xf32> -> vector<128x256xf32>
    %c2_50 = arith.constant 2 : index
    %c0_51 = arith.constant 0 : index
    %c0_52 = arith.constant 0 : index
    %78 = vector.load %arg2[%c2_50, %c0_51, %c0_52] : memref<3x128x1xf32, #tpu.memory_space<vmem>>, vector<1x128x1xf32>
    %79 = vector.shape_cast %78 : vector<1x128x1xf32> to vector<128x1xf32>
    %80 = vector.broadcast %79 : vector<128x1xf32> to vector<128x256xf32>
    %81 = arith.addf %77, %80 : vector<128x256xf32>
    %cst_53 = arith.constant 0.000000e+00 : f32
    %82 = vector.broadcast %cst_53 : f32 to vector<128x256xf32>
    %83 = arith.maximumf %81, %82 : vector<128x256xf32>
    %84 = arith.truncf %83 : vector<128x256xf32> to vector<128x256xbf16>
    %cst_54 = arith.constant dense<0.000000e+00> : vector<32x256xf32>
    %85 = tpu.matmul %3, %84, %cst_54 {dimension_numbers = #tpu.dot_dimension_numbers<[1], [0], [0], [1], [0, 0, 1, 1], [], []>} : vector<32x128xbf16>, vector<128x256xbf16>, vector<32x256xf32> -> vector<32x256xf32>
    %86 = vector.broadcast %6 : vector<32x1xf32> to vector<32x256xf32>
    %87 = arith.addf %85, %86 : vector<32x256xf32>
    %c2_55 = arith.constant 2 : index
    %c0_56 = arith.constant 0 : index
    %c0_57 = arith.constant 0 : index
    %88 = vector.load %arg10[%c2_55, %c0_56, %c0_57] : memref<3x32x256xf32, #tpu.memory_space<vmem>>, vector<1x32x256xf32>
    %89 = vector.shape_cast %88 : vector<1x32x256xf32> to vector<32x256xf32>
    %90 = vector.shape_cast %87 : vector<32x256xf32> to vector<1x32x256xf32>
    tpu.vector_store %arg10[%c2_55, %c0_56, %c0_57], %90 {strides = array<i32>} : memref<3x32x256xf32, #tpu.memory_space<vmem>>, vector<1x32x256xf32>,
    return
  }
  func.func @transform_0(%arg0: i32) -> (i32, i32, i32) {
    %c0_i32 = arith.constant 0 : i32
    %c0_i32_0 = arith.constant 0 : i32
    %c0_i32_1 = arith.constant 0 : i32
    return %arg0, %c0_i32, %c0_i32_0 : i32, i32, i32
  }
  func.func @transform_1(%arg0: i32) -> (i32, i32, i32) {
    %c0_i32 = arith.constant 0 : i32
    %c0_i32_0 = arith.constant 0 : i32
    %c0_i32_1 = arith.constant 0 : i32
    return %arg0, %c0_i32, %c0_i32_0 : i32, i32, i32
  }
  func.func @transform_2(%arg0: i32) -> (i32, i32) {
    %c0_i32 = arith.constant 0 : i32
    %c0_i32_0 = arith.constant 0 : i32
    %c0_i32_1 = arith.constant 0 : i32
    return %c0_i32, %c0_i32_0 : i32, i32
  }
  func.func @transform_3(%arg0: i32) -> (i32, i32) {
    %c0_i32 = arith.constant 0 : i32
    %c0_i32_0 = arith.constant 0 : i32
    %c0_i32_1 = arith.constant 0 : i32
    return %c0_i32, %c0_i32_0 : i32, i32
  }
  func.func @transform_4(%arg0: i32) -> (i32, i32) {
    %c0_i32 = arith.constant 0 : i32
    %c0_i32_0 = arith.constant 0 : i32
    %c0_i32_1 = arith.constant 0 : i32
    return %c0_i32, %c0_i32_0 : i32, i32
  }
  func.func @transform_5(%arg0: i32) -> (i32, i32) {
    %c0_i32 = arith.constant 0 : i32
    %c0_i32_0 = arith.constant 0 : i32
    %c0_i32_1 = arith.constant 0 : i32
    return %c0_i32, %c0_i32_0 : i32, i32
  }
  func.func @transform_6(%arg0: i32) -> (i32, i32) {
    %c0_i32 = arith.constant 0 : i32
    %c0_i32_0 = arith.constant 0 : i32
    %c0_i32_1 = arith.constant 0 : i32
    return %c0_i32, %c0_i32_0 : i32, i32
  }
  func.func @transform_7(%arg0: i32) -> (i32, i32) {
    %c0_i32 = arith.constant 0 : i32
    %c0_i32_0 = arith.constant 0 : i32
    %c0_i32_1 = arith.constant 0 : i32
    return %c0_i32, %c0_i32_0 : i32, i32
  }
  func.func @transform_8(%arg0: i32) -> (i32, i32) {
    %c0_i32 = arith.constant 0 : i32
    %c0_i32_0 = arith.constant 0 : i32
    %c0_i32_1 = arith.constant 0 : i32
    return %c0_i32, %c0_i32_0 : i32, i32
  }
  func.func @transform_9(%arg0: i32) -> (i32, i32, i32) {
    %c0_i32 = arith.constant 0 : i32
    %c0_i32_0 = arith.constant 0 : i32
    %c0_i32_1 = arith.constant 0 : i32
    return %arg0, %c0_i32, %c0_i32_0 : i32, i32, i32
  }
}

</mosaic_0001>

<llo_original>
// kernel: resnet_tensor_goal_encoder_forward.1
$region0: #{resnet_tensor_goal_encoder_forward.1}
  #allocation0 [shape = 'u32[]', space=smem, size = 0x4, offset = 0x4, fixed_abs, tag = 'smem constant byte address 0x4 - core index']
  #allocation1 [shape = 'u32[144,128]{1,0:T(1,128)}', space=vmem, size = 0x12000, scoped, tag = 'internal scratch']
  %s0 = inlined_call_operand.vmem [shape: bf16[6,16,256], index: 0, kind: input, shape index: {}]
  %s1 = inlined_call_operand.vmem [shape: f32[6,128,1], index: 1, kind: input, shape index: {}]
  %s2 = inlined_call_operand.vmem [shape: bf16[128,16], index: 2, kind: input, shape index: {}]
  %s3 = inlined_call_operand.vmem [shape: f32[128,1], index: 3, kind: input, shape index: {}]
  %s4 = inlined_call_operand.vmem [shape: bf16[32,128], index: 4, kind: input, shape index: {}]
  %s5 = inlined_call_operand.vmem [shape: f32[32,1], index: 5, kind: input, shape index: {}]
  %s6 = inlined_call_operand.vmem [shape: bf16[128,32], index: 6, kind: input, shape index: {}]
  %s7 = inlined_call_operand.vmem [shape: bf16[32,128], index: 7, kind: input, shape index: {}]
  %s8 = inlined_call_operand.vmem [shape: f32[32,1], index: 8, kind: input, shape index: {}]
  %s9 = inlined_call_operand.vmem [shape: f32[6,32,256], index: 9, kind: output, shape index: {}]
  %s10 = sld [smem:[#allocation0]]
  $region69: #{resnet_tensor_goal_encoder_forward.1} parent=0
    _
  %s12 = ssub.s32 1, %s10
  %s13 = scalar_select 0, %s12, %s10
  loop: start=0, step=1, limit=4
  $region2: #{resnet_tensor_goal_encoder_forward.1} parent=0 // loop_pre_header
    _
  $region3: #{resnet_tensor_goal_encoder_forward.1} parent=0 // loop_header
    %s15 = sphi 0, %s19
    %p16 = scmp.ge.s32.totalorder %s15, 4
    %s25 = sphi 0, %s27
    %s28 = sphi 0, %s25
    %s29 = sphi 0, %s28
    %s45 = sphi 0, %s29
    %s51 = sphi 0, %s53
    %s54 = sphi 0, %s51
    %s55 = sphi 0, %s54
    %s71 = sphi 0, %s55
    %s75 = sphi 0, %s75
    %s77 = sphi 0, %s75
    %s78 = sphi 0, %s77
    %s92 = sphi 0, %s78
    %s96 = sphi 0, %s96
    %s98 = sphi 0, %s96
    %s99 = sphi 0, %s98
    %s113 = sphi 0, %s99
    %s117 = sphi 0, %s117
    %s119 = sphi 0, %s117
    %s120 = sphi 0, %s119
    %s134 = sphi 0, %s120
    %s138 = sphi 0, %s138
    %s140 = sphi 0, %s138
    %s141 = sphi 0, %s140
    %s155 = sphi 0, %s141
    %s159 = sphi 0, %s159
    %s161 = sphi 0, %s159
    %s162 = sphi 0, %s161
    %s176 = sphi 0, %s162
    %s180 = sphi 0, %s180
    %s182 = sphi 0, %s180
    %s183 = sphi 0, %s182
    %s197 = sphi 0, %s183
    %s201 = sphi 0, %s201
    %s203 = sphi 0, %s201
    %s204 = sphi 0, %s203
    %s218 = sphi 0, %s204
    %s224 = sphi 0, %s226
    %s227 = sphi 0, %s224
    %s228 = sphi 0, %s227
    %s244 = sphi 0, %s228
  $region4: #{resnet_tensor_goal_encoder_forward.1} parent=0 // loop_header_branch
    %18 = sbr.rel (%p16) target = $region8
  $region5: #{resnet_tensor_goal_encoder_forward.1} parent=0 // loop_body
    %s20 = ssub.s32 %s15, 1
    %s21 = ssub.s32 %s15, 2
    %s22 = sadd.s32 %s15, 1
    %s23 = ssub.s32 %s15, %s22
    %p24 = scmp.eq.s32.totalorder %s23, 0
    %s26 = sadd.s32 %s25, 1
    %s27 = scalar_select %p24, %s25, %s26
    %p30 = pneg %p24
    %p31 = scmp.eq.s32.totalorder %s15, 1
    %p32 = por %p30, %p31
    %p33 = scmp.ne.s32.totalorder %s25, %s28
    %p34 = scmp.eq.s32.totalorder %s15, 0
    %p35 = por %p33, %p34
    %p36 = scmp.ne.s32.totalorder %s25, %s28
    %p37 = scmp.eq.s32.totalorder %s20, 1
    %p38 = por %p36, %p37
    %p39 = scmp.ne.s32.totalorder %s28, %s29
    %p40 = scmp.eq.s32.totalorder %s20, 0
    %p41 = por %p39, %p40
    %p42 = scmp.ne.s32.totalorder %s28, %s29
    %p43 = scmp.eq.s32.totalorder %s21, 1
    %p44 = por %p42, %p43
    %p46 = scmp.ne.s32.totalorder %s29, %s45
    %p47 = scmp.eq.s32.totalorder %s21, 0
    %p48 = por %p46, %p47
    %s49 = ssub.s32 %s15, %s22
    %p50 = scmp.eq.s32.totalorder %s49, 0
    %s52 = sadd.s32 %s51, 1
    %s53 = scalar_select %p50, %s51, %s52
    %p56 = pneg %p50
    %p57 = scmp.eq.s32.totalorder %s15, 1
    %p58 = por %p56, %p57
    %p59 = scmp.ne.s32.totalorder %s51, %s54
    %p60 = scmp.eq.s32.totalorder %s15, 0
    %p61 = por %p59, %p60
    %p62 = scmp.ne.s32.totalorder %s51, %s54
    %p63 = scmp.eq.s32.totalorder %s20, 1
    %p64 = por %p62, %p63
    %p65 = scmp.ne.s32.totalorder %s54, %s55
    %p66 = scmp.eq.s32.totalorder %s20, 0
    %p67 = por %p65, %p66
    %p68 = scmp.ne.s32.totalorder %s54, %s55
    %p69 = scmp.eq.s32.totalorder %s21, 1
    %p70 = por %p68, %p69
    %p72 = scmp.ne.s32.totalorder %s55, %s71
    %p73 = scmp.eq.s32.totalorder %s21, 0
    %p74 = por %p72, %p73
    %s76 = sadd.s32 %s75, 1
    %p79 = scmp.eq.s32.totalorder %s15, 1
    %p80 = scmp.ne.s32.totalorder %s75, %s77
    %p81 = scmp.eq.s32.totalorder %s15, 0
    %p82 = por %p80, %p81
    %p83 = scmp.ne.s32.totalorder %s75, %s77
    %p84 = scmp.eq.s32.totalorder %s20, 1
    %p85 = por %p83, %p84
    %p86 = scmp.ne.s32.totalorder %s77, %s78
    %p87 = scmp.eq.s32.totalorder %s20, 0
    %p88 = por %p86, %p87
    %p89 = scmp.ne.s32.totalorder %s77, %s78
    %p90 = scmp.eq.s32.totalorder %s21, 1
    %p91 = por %p89, %p90
    %p93 = scmp.ne.s32.totalorder %s78, %s92
    %p94 = scmp.eq.s32.totalorder %s21, 0
    %p95 = por %p93, %p94
    %s97 = sadd.s32 %s96, 1
    %p100 = scmp.eq.s32.totalorder %s15, 1
    %p101 = scmp.ne.s32.totalorder %s96, %s98
    %p102 = scmp.eq.s32.totalorder %s15, 0
    %p103 = por %p101, %p102
    %p104 = scmp.ne.s32.totalorder %s96, %s98
    %p105 = scmp.eq.s32.totalorder %s20, 1
    %p106 = por %p104, %p105
    %p107 = scmp.ne.s32.totalorder %s98, %s99
    %p108 = scmp.eq.s32.totalorder %s20, 0
    %p109 = por %p107, %p108
    %p110 = scmp.ne.s32.totalorder %s98, %s99
    %p111 = scmp.eq.s32.totalorder %s21, 1
    %p112 = por %p110, %p111
    %p114 = scmp.ne.s32.totalorder %s99, %s113
    %p115 = scmp.eq.s32.totalorder %s21, 0
    %p116 = por %p114, %p115
    %s118 = sadd.s32 %s117, 1
    %p121 = scmp.eq.s32.totalorder %s15, 1
    %p122 = scmp.ne.s32.totalorder %s117, %s119
    %p123 = scmp.eq.s32.totalorder %s15, 0
    %p124 = por %p122, %p123
    %p125 = scmp.ne.s32.totalorder %s117, %s119
    %p126 = scmp.eq.s32.totalorder %s20, 1
    %p127 = por %p125, %p126
    %p128 = scmp.ne.s32.totalorder %s119, %s120
    %p129 = scmp.eq.s32.totalorder %s20, 0
    %p130 = por %p128, %p129
    %p131 = scmp.ne.s32.totalorder %s119, %s120
    %p132 = scmp.eq.s32.totalorder %s21, 1
    %p133 = por %p131, %p132
    %p135 = scmp.ne.s32.totalorder %s120, %s134
    %p136 = scmp.eq.s32.totalorder %s21, 0
    %p137 = por %p135, %p136
    %s139 = sadd.s32 %s138, 1
    %p142 = scmp.eq.s32.totalorder %s15, 1
    %p143 = scmp.ne.s32.totalorder %s138, %s140
    %p144 = scmp.eq.s32.totalorder %s15, 0
    %p145 = por %p143, %p144
    %p146 = scmp.ne.s32.totalorder %s138, %s140
    %p147 = scmp.eq.s32.totalorder %s20, 1
    %p148 = por %p146, %p147
    %p149 = scmp.ne.s32.totalorder %s140, %s141
    %p150 = scmp.eq.s32.totalorder %s20, 0
    %p151 = por %p149, %p150
    %p152 = scmp.ne.s32.totalorder %s140, %s141
    %p153 = scmp.eq.s32.totalorder %s21, 1
    %p154 = por %p152, %p153
    %p156 = scmp.ne.s32.totalorder %s141, %s155
    %p157 = scmp.eq.s32.totalorder %s21, 0
    %p158 = por %p156, %p157
    %s160 = sadd.s32 %s159, 1
    %p163 = scmp.eq.s32.totalorder %s15, 1
    %p164 = scmp.ne.s32.totalorder %s159, %s161
    %p165 = scmp.eq.s32.totalorder %s15, 0
    %p166 = por %p164, %p165
    %p167 = scmp.ne.s32.totalorder %s159, %s161
    %p168 = scmp.eq.s32.totalorder %s20, 1
    %p169 = por %p167, %p168
    %p170 = scmp.ne.s32.totalorder %s161, %s162
    %p171 = scmp.eq.s32.totalorder %s20, 0
    %p172 = por %p170, %p171
    %p173 = scmp.ne.s32.totalorder %s161, %s162
    %p174 = scmp.eq.s32.totalorder %s21, 1
    %p175 = por %p173, %p174
    %p177 = scmp.ne.s32.totalorder %s162, %s176
    %p178 = scmp.eq.s32.totalorder %s21, 0
    %p179 = por %p177, %p178
    %s181 = sadd.s32 %s180, 1
    %p184 = scmp.eq.s32.totalorder %s15, 1
    %p185 = scmp.ne.s32.totalorder %s180, %s182
    %p186 = scmp.eq.s32.totalorder %s15, 0
    %p187 = por %p185, %p186
    %p188 = scmp.ne.s32.totalorder %s180, %s182
    %p189 = scmp.eq.s32.totalorder %s20, 1
    %p190 = por %p188, %p189
    %p191 = scmp.ne.s32.totalorder %s182, %s183
    %p192 = scmp.eq.s32.totalorder %s20, 0
    %p193 = por %p191, %p192
    %p194 = scmp.ne.s32.totalorder %s182, %s183
    %p195 = scmp.eq.s32.totalorder %s21, 1
    %p196 = por %p194, %p195
    %p198 = scmp.ne.s32.totalorder %s183, %s197
    %p199 = scmp.eq.s32.totalorder %s21, 0
    %p200 = por %p198, %p199
    %s202 = sadd.s32 %s201, 1
    %p205 = scmp.eq.s32.totalorder %s15, 1
    %p206 = scmp.ne.s32.totalorder %s201, %s203
    %p207 = scmp.eq.s32.totalorder %s15, 0
    %p208 = por %p206, %p207
    %p209 = scmp.ne.s32.totalorder %s201, %s203
    %p210 = scmp.eq.s32.totalorder %s20, 1
    %p211 = por %p209, %p210
    %p212 = scmp.ne.s32.totalorder %s203, %s204
    %p213 = scmp.eq.s32.totalorder %s20, 0
    %p214 = por %p212, %p213
    %p215 = scmp.ne.s32.totalorder %s203, %s204
    %p216 = scmp.eq.s32.totalorder %s21, 1
    %p217 = por %p215, %p216
    %p219 = scmp.ne.s32.totalorder %s204, %s218
    %p220 = scmp.eq.s32.totalorder %s21, 0
    %p221 = por %p219, %p220
    %s222 = ssub.s32 %s15, %s22
    %p223 = scmp.eq.s32.totalorder %s222, 0
    %s225 = sadd.s32 %s224, 1
    %s226 = scalar_select %p223, %s224, %s225
    %p229 = pneg %p223
    %p230 = scmp.eq.s32.totalorder %s15, 1
    %p231 = por %p229, %p230
    %p232 = scmp.ne.s32.totalorder %s224, %s227
    %p233 = scmp.eq.s32.totalorder %s15, 0
    %p234 = por %p232, %p233
    %p235 = scmp.ne.s32.totalorder %s224, %s227
    %p236 = scmp.eq.s32.totalorder %s20, 1
    %p237 = por %p235, %p236
    %p238 = scmp.ne.s32.totalorder %s227, %s228
    %p239 = scmp.eq.s32.totalorder %s20, 0
    %p240 = por %p238, %p239
    %p241 = scmp.ne.s32.totalorder %s227, %s228
    %p242 = scmp.eq.s32.totalorder %s21, 1
    %p243 = por %p241, %p242
    %p245 = scmp.ne.s32.totalorder %s228, %s244
    %p246 = scmp.eq.s32.totalorder %s21, 0
    %p247 = por %p245, %p246
    %p248 = scmp.le.s32.totalorder 1, %s15
    %p249 = scmp.lt.s32.totalorder %s15, 3
    %p250 = pnand %p248, %p249
    %p251 = pneg %p250
    // Predicated region
    $region9: #{resnet_tensor_goal_encoder_forward.1} parent=5 // pred_check
      _
    $region10: #{resnet_tensor_goal_encoder_forward.1} parent=5 // pred_check_branch
      %253 = sbr.rel (%p250) target = $region12
    $region11: #{resnet_tensor_goal_encoder_forward.1} parent=5 // pred_region
      %s254 = ssub.s32 %s15, 1
      // Predicated region
      $region13: #{resnet_tensor_goal_encoder_forward.1} parent=11 // pred_check
        %p255 = pneg %p88
      $region14: #{resnet_tensor_goal_encoder_forward.1} parent=11 // pred_check_branch
        %257 = sbr.rel (%p255) target = $region16
      $region15: #{resnet_tensor_goal_encoder_forward.1} parent=11 // pred_region
        _
      $region16: #{resnet_tensor_goal_encoder_forward.1} parent=11 // pred_fallthru
        _
      // Predicated region
      $region17: #{resnet_tensor_goal_encoder_forward.1} parent=11 // pred_check
        %p258 = pneg %p109
      $region18: #{resnet_tensor_goal_encoder_forward.1} parent=11 // pred_check_branch
        %260 = sbr.rel (%p258) target = $region20
      $region19: #{resnet_tensor_goal_encoder_forward.1} parent=11 // pred_region
        _
      $region20: #{resnet_tensor_goal_encoder_forward.1} parent=11 // pred_fallthru
        _
      // Predicated region
      $region21: #{resnet_tensor_goal_encoder_forward.1} parent=11 // pred_check
        %p261 = pneg %p130
      $region22: #{resnet_tensor_goal_encoder_forward.1} parent=11 // pred_check_branch
        %263 = sbr.rel (%p261) target = $region24
      $region23: #{resnet_tensor_goal_encoder_forward.1} parent=11 // pred_region
        _
      $region24: #{resnet_tensor_goal_encoder_forward.1} parent=11 // pred_fallthru
        _
      // Predicated region
      $region25: #{resnet_tensor_goal_encoder_forward.1} parent=11 // pred_check
        %p264 = pneg %p151
      $region26: #{resnet_tensor_goal_encoder_forward.1} parent=11 // pred_check_branch
        %266 = sbr.rel (%p264) target = $region28
      $region27: #{resnet_tensor_goal_encoder_forward.1} parent=11 // pred_region
        _
      $region28: #{resnet_tensor_goal_encoder_forward.1} parent=11 // pred_fallthru
        _
      // Predicated region
      $region29: #{resnet_tensor_goal_encoder_forward.1} parent=11 // pred_check
        %p267 = pneg %p172
      $region30: #{resnet_tensor_goal_encoder_forward.1} parent=11 // pred_check_branch
        %269 = sbr.rel (%p267) target = $region32
      $region31: #{resnet_tensor_goal_encoder_forward.1} parent=11 // pred_region
        _
      $region32: #{resnet_tensor_goal_encoder_forward.1} parent=11 // pred_fallthru
        _
      // Predicated region
      $region33: #{resnet_tensor_goal_encoder_forward.1} parent=11 // pred_check
        %p270 = pneg %p193
      $region34: #{resnet_tensor_goal_encoder_forward.1} parent=11 // pred_check_branch
        %272 = sbr.rel (%p270) target = $region36
      $region35: #{resnet_tensor_goal_encoder_forward.1} parent=11 // pred_region
        _
      $region36: #{resnet_tensor_goal_encoder_forward.1} parent=11 // pred_fallthru
        _
      // Predicated region
      $region37: #{resnet_tensor_goal_encoder_forward.1} parent=11 // pred_check
        %p273 = pneg %p214
      $region38: #{resnet_tensor_goal_encoder_forward.1} parent=11 // pred_check_branch
        %275 = sbr.rel (%p273) target = $region40
      $region39: #{resnet_tensor_goal_encoder_forward.1} parent=11 // pred_region
        _
      $region40: #{resnet_tensor_goal_encoder_forward.1} parent=11 // pred_fallthru
        _
    $region12: #{resnet_tensor_goal_encoder_forward.1} parent=5 // pred_fallthru
      _
    %p276 = scmp.lt.s32.totalorder %s15, 2
    // Predicated region
    $region41: #{resnet_tensor_goal_encoder_forward.1} parent=5 // pred_check
      %p277 = pneg %p276
    $region42: #{resnet_tensor_goal_encoder_forward.1} parent=5 // pred_check_branch
      %279 = sbr.rel (%p277) target = $region44
    $region43: #{resnet_tensor_goal_encoder_forward.1} parent=5 // pred_region
      // Predicated region
      $region45: #{resnet_tensor_goal_encoder_forward.1} parent=43 // pred_check
        %p280 = pneg %p35
      $region46: #{resnet_tensor_goal_encoder_forward.1} parent=43 // pred_check_branch
        %282 = sbr.rel (%p280) target = $region48
      $region47: #{resnet_tensor_goal_encoder_forward.1} parent=43 // pred_region
        %s283 = smul.u32 3, %s15
        %p284 = scmp.lt.s32.totalorder %s283, 5
        %s285 = scalar_select %p284, %s283, 5
        %s286 = smul.addr %s285, 4
        %s287 = smul.addr %s286, 4
        %s288 = scalar_lea.vmem %s0, %s287
        %s289 = smul.u32 3, %s15
      $region48: #{resnet_tensor_goal_encoder_forward.1} parent=43 // pred_fallthru
        _
      // Predicated region
      $region49: #{resnet_tensor_goal_encoder_forward.1} parent=43 // pred_check
        %p290 = pneg %p61
      $region50: #{resnet_tensor_goal_encoder_forward.1} parent=43 // pred_check_branch
        %292 = sbr.rel (%p290) target = $region52
      $region51: #{resnet_tensor_goal_encoder_forward.1} parent=43 // pred_region
        %s293 = smul.u32 3, %s15
        %p294 = scmp.lt.s32.totalorder %s293, 5
        %s295 = scalar_select %p294, %s293, 5
        %s296 = smul.addr %s295, 16
        %s297 = smul.addr %s296, 8
        %s298 = scalar_lea.vmem %s1, %s297
        %s299 = smul.u32 3, %s15
      $region52: #{resnet_tensor_goal_encoder_forward.1} parent=43 // pred_fallthru
        _
    $region44: #{resnet_tensor_goal_encoder_forward.1} parent=5 // pred_fallthru
      _
    %p300 = scmp.le.s32.totalorder 1, %s15
    %p301 = scmp.lt.s32.totalorder %s15, 3
    %p302 = pnand %p300, %p301
    %p303 = pneg %p302
    // Predicated region
    $region53: #{resnet_tensor_goal_encoder_forward.1} parent=5 // pred_check
      _
    $region54: #{resnet_tensor_goal_encoder_forward.1} parent=5 // pred_check_branch
      %305 = sbr.rel (%p302) target = $region56
    $region55: #{resnet_tensor_goal_encoder_forward.1} parent=5 // pred_region
      %s306 = ssub.s32 %s15, 1
      %s307 = smul.u32 3, %s20
      %p308 = scmp.lt.s32.totalorder %s307, 5
      %s309 = scalar_select %p308, %s307, 5
      %s310 = smul.addr %s309, 4
      %s311 = smul.addr %s310, 4
      %s312 = scalar_lea.vmem %s0, %s311
      %p313 = pneg %p41
      %p314 = pneg %p38
      %s315 = smul.u32 3, %s20
      %p316 = scmp.lt.s32.totalorder %s315, 5
      %s317 = scalar_select %p316, %s315, 5
      %s318 = smul.addr %s317, 16
      %s319 = smul.addr %s318, 8
      %s320 = scalar_lea.vmem %s1, %s319
      %p321 = pneg %p67
      %p322 = pneg %p64
      %p323 = pneg %p88
      %p324 = pneg %p85
      %p325 = pneg %p109
      %p326 = pneg %p106
      %p327 = pneg %p130
      %p328 = pneg %p127
      %p329 = pneg %p151
      %p330 = pneg %p148
      %p331 = pneg %p172
      %p332 = pneg %p169
      %p333 = pneg %p193
      %p334 = pneg %p190
      %p335 = pneg %p214
      %p336 = pneg %p211
      %p337 = pneg %p240
      %p338 = pneg %p237
      %s339 = smul.u32 3, %s20
      %p340 = scmp.lt.s32.totalorder %s339, 5
      %s341 = scalar_select %p340, %s339, 5
      %s342 = smul.addr %s341, 8
      %s343 = smul.addr %s342, 8
      %s344 = scalar_lea.vmem %s9, %s343
      %s345 = smul.u32 3, %s20
      %p346 = scmp.lt.s32.totalorder %s345, 5
      %s347 = scalar_select %p346, %s345, 5
      %s348 = smul.addr %s347, 4
      %s349 = smul.addr %s348, 4
      %s350 = scalar_lea.vmem %s0, %s349
      %s351 = smul.u32 3, %s20
      %s352 = smul.u32 3, %s20
      %p353 = scmp.lt.s32.totalorder %s352, 5
      %s354 = scalar_select %p353, %s352, 5
      %s355 = smul.addr %s354, 16
      %s356 = smul.addr %s355, 8
      %s357 = scalar_lea.vmem %s1, %s356
      %s358 = smul.u32 3, %s20
      %s359 = smul.u32 3, %s20
      %p360 = scmp.lt.s32.totalorder %s359, 5
      %s361 = scalar_select %p360, %s359, 5
      %s362 = smul.addr %s361, 8
      %s363 = smul.addr %s362, 8
      %s364 = scalar_lea.vmem %s9, %s363
      %s365 = smul.u32 3, %s20
      %v367 = vld [vmem:[%s2] sm:$0xf]
      %v368 = vld [vmem:[%s2 + $0x4] sm:$0xf]
      %v369 = vld [vmem:[%s2 + $0x8] sm:$0xf]
      %v370 = vld [vmem:[%s2 + $0xc] sm:$0xf]
      %v371 = vld [vmem:[%s2 + $0x10] sm:$0xf]
      %v372 = vld [vmem:[%s2 + $0x14] sm:$0xf]
      %v373 = vld [vmem:[%s2 + $0x18] sm:$0xf]
      %v374 = vld [vmem:[%s2 + $0x1c] sm:$0xf]
      %v375 = vld [vmem:[%s2 + $0x20] sm:$0xf]
      %v376 = vld [vmem:[%s2 + $0x24] sm:$0xf]
      %v377 = vld [vmem:[%s2 + $0x28] sm:$0xf]
      %v378 = vld [vmem:[%s2 + $0x2c] sm:$0xf]
      %v379 = vld [vmem:[%s2 + $0x30] sm:$0xf]
      %v380 = vld [vmem:[%s2 + $0x34] sm:$0xf]
      %v381 = vld [vmem:[%s2 + $0x38] sm:$0xf]
      %v382 = vld [vmem:[%s2 + $0x3c] sm:$0xf]
      %v383 = vld [vmem:[%s4] sm:$0xf]
      %v384 = vld [vmem:[%s4 + $0x4] sm:$0xf]
      %v385 = vld [vmem:[%s4 + $0x8] sm:$0xf]
      %v386 = vld [vmem:[%s4 + $0xc] sm:$0xf]
      %v387 = vld [vmem:[%s6] sm:$0xf]
      %v388 = vld [vmem:[%s6 + $0x4] sm:$0xf]
      %v389 = vld [vmem:[%s6 + $0x8] sm:$0xf]
      %v390 = vld [vmem:[%s6 + $0xc] sm:$0xf]
      %v391 = vld [vmem:[%s6 + $0x10] sm:$0xf]
      %v392 = vld [vmem:[%s6 + $0x14] sm:$0xf]
      %v393 = vld [vmem:[%s6 + $0x18] sm:$0xf]
      %v394 = vld [vmem:[%s6 + $0x1c] sm:$0xf]
      %v395 = vld [vmem:[%s6 + $0x20] sm:$0xf]
      %v396 = vld [vmem:[%s6 + $0x24] sm:$0xf]
      %v397 = vld [vmem:[%s6 + $0x28] sm:$0xf]
      %v398 = vld [vmem:[%s6 + $0x2c] sm:$0xf]
      %v399 = vld [vmem:[%s6 + $0x30] sm:$0xf]
      %v400 = vld [vmem:[%s6 + $0x34] sm:$0xf]
      %v401 = vld [vmem:[%s6 + $0x38] sm:$0xf]
      %v402 = vld [vmem:[%s6 + $0x3c] sm:$0xf]
      %v403 = vld [vmem:[%s7] sm:$0xf]
      %v404 = vld [vmem:[%s7 + $0x4] sm:$0xf]
      %v405 = vld [vmem:[%s7 + $0x8] sm:$0xf]
      %v406 = vld [vmem:[%s7 + $0xc] sm:$0xf]
      %v407 = vld [vmem:[%s3] sm:$0xff]
      %v408 = vld [vmem:[%s3 + $0x8] sm:$0xff]
      %v409 = vld [vmem:[%s3 + $0x10] sm:$0xff]
      %v410 = vld [vmem:[%s3 + $0x18] sm:$0xff]
      %v411 = vld [vmem:[%s3 + $0x20] sm:$0xff]
      %v412 = vld [vmem:[%s3 + $0x28] sm:$0xff]
      %v413 = vld [vmem:[%s3 + $0x30] sm:$0xff]
      %v414 = vld [vmem:[%s3 + $0x38] sm:$0xff]
      %v415 = vld [vmem:[%s3 + $0x40] sm:$0xff]
      %v416 = vld [vmem:[%s3 + $0x48] sm:$0xff]
      %v417 = vld [vmem:[%s3 + $0x50] sm:$0xff]
      %v418 = vld [vmem:[%s3 + $0x58] sm:$0xff]
      %v419 = vld [vmem:[%s3 + $0x60] sm:$0xff]
      %v420 = vld [vmem:[%s3 + $0x68] sm:$0xff]
      %v421 = vld [vmem:[%s3 + $0x70] sm:$0xff]
      %v422 = vld [vmem:[%s3 + $0x78] sm:$0xff]
      %v423 = vld [vmem:[%s5] sm:$0xff]
      %v424 = vld [vmem:[%s5 + $0x8] sm:$0xff]
      %v425 = vld [vmem:[%s5 + $0x10] sm:$0xff]
      %v426 = vld [vmem:[%s5 + $0x18] sm:$0xff]
      %v427 = vld [vmem:[%s8] sm:$0xff]
      %v428 = vld [vmem:[%s8 + $0x8] sm:$0xff]
      %v429 = vld [vmem:[%s8 + $0x10] sm:$0xff]
      %v430 = vld [vmem:[%s8 + $0x18] sm:$0xff]
      %v431 = vld [vmem:[%s350] sm:$0xff]
      %v432 = vld [vmem:[%s350 + $0x8] sm:$0xff]
      %434 = vset.pattern.permute.xlu0 0
      %435 = vperm.xlu0 %434, %v407
      %v436 = vpop.permute.xlu0 %435
      %439 = vset.pattern.permute.xlu0 0
      %440 = vperm.xlu0 %439, %v408
      %v441 = vpop.permute.xlu0 %440
      %444 = vset.pattern.permute.xlu0 0
      %445 = vperm.xlu0 %444, %v409
      %v446 = vpop.permute.xlu0 %445
      %449 = vset.pattern.permute.xlu0 0
      %450 = vperm.xlu0 %449, %v410
      %v451 = vpop.permute.xlu0 %450
      %454 = vset.pattern.permute.xlu0 0
      %455 = vperm.xlu0 %454, %v411
      %v456 = vpop.permute.xlu0 %455
      %459 = vset.pattern.permute.xlu0 0
      %460 = vperm.xlu0 %459, %v412
      %v461 = vpop.permute.xlu0 %460
      %464 = vset.pattern.permute.xlu0 0
      %465 = vperm.xlu0 %464, %v413
      %v466 = vpop.permute.xlu0 %465
      %469 = vset.pattern.permute.xlu0 0
      %470 = vperm.xlu0 %469, %v414
      %v471 = vpop.permute.xlu0 %470
      %474 = vset.pattern.permute.xlu0 0
      %475 = vperm.xlu0 %474, %v415
      %v476 = vpop.permute.xlu0 %475
      %479 = vset.pattern.permute.xlu0 0
      %480 = vperm.xlu0 %479, %v416
      %v481 = vpop.permute.xlu0 %480
      %484 = vset.pattern.permute.xlu0 0
      %485 = vperm.xlu0 %484, %v417
      %v486 = vpop.permute.xlu0 %485
      %489 = vset.pattern.permute.xlu0 0
      %490 = vperm.xlu0 %489, %v418
      %v491 = vpop.permute.xlu0 %490
      %494 = vset.pattern.permute.xlu0 0
      %495 = vperm.xlu0 %494, %v419
      %v496 = vpop.permute.xlu0 %495
      %499 = vset.pattern.permute.xlu0 0
      %500 = vperm.xlu0 %499, %v420
      %v501 = vpop.permute.xlu0 %500
      %504 = vset.pattern.permute.xlu0 0
      %505 = vperm.xlu0 %504, %v421
      %v506 = vpop.permute.xlu0 %505
      %509 = vset.pattern.permute.xlu0 0
      %510 = vperm.xlu0 %509, %v422
      %v511 = vpop.permute.xlu0 %510
      %v529 = vunpack.c.l.b16 %v367
      %v530 = vunpack.c.l.b16 %v368
      %v531 = vunpack.c.l.b16 %v369
      %v532 = vunpack.c.l.b16 %v370
      %v533 = vunpack.c.l.b16 %v371
      %v534 = vunpack.c.l.b16 %v372
      %v535 = vunpack.c.l.b16 %v373
      %v536 = vunpack.c.l.b16 %v374
      %v537 = vunpack.c.l.b16 %v375
      %v538 = vunpack.c.l.b16 %v376
      %v539 = vunpack.c.l.b16 %v377
      %v540 = vunpack.c.l.b16 %v378
      %v541 = vunpack.c.l.b16 %v379
      %v542 = vunpack.c.l.b16 %v380
      %v543 = vunpack.c.l.b16 %v381
      %v544 = vunpack.c.l.b16 %v382
      %v545 = vpack.c.b16 %v530, %v529
      %v546 = vpack.c.b16 %v532, %v531
      %v547 = vpack.c.b16 %v534, %v533
      %v548 = vpack.c.b16 %v536, %v535
      %v549 = vpack.c.b16 %v538, %v537
      %v550 = vpack.c.b16 %v540, %v539
      %v551 = vpack.c.b16 %v542, %v541
      %v552 = vpack.c.b16 %v544, %v543
      %v555 = vunpack.c.l.b16 %v431
      %v556 = vunpack.c.h.b16 %v431
      %v557 = vunpack.c.l.b16 %v432
      %v558 = vunpack.c.h.b16 %v432
      %v559 = vpack.c.b16 %v557, %v555
      %v560 = vpack.c.b16 %v558, %v556
      %vm563 = vcmask 130048
      %v565 = vsel %vm563, %v545, 0
      %v568 = vsel %vm563, %v546, 0
      %v571 = vsel %vm563, %v547, 0
      %v574 = vsel %vm563, %v548, 0
      %v577 = vsel %vm563, %v549, 0
      %v580 = vsel %vm563, %v550, 0
      %v583 = vsel %vm563, %v551, 0
      %v586 = vsel %vm563, %v552, 0
      %588 = vmatprep.subr.bf16.mxu0 %v560
      %589 = vmatpush1.bf16.msra.mxu0 %v559
      %590 = vmatprep.subr.bf16.mxu0 0
      %591 = vmatpush1.bf16.msra.mxu0 0
      %592 = vmatprep.subr.bf16.mxu0 0
      %593 = vmatpush1.bf16.msra.mxu0 0
      %594 = vmatprep.subr.bf16.mxu0 0
      %595 = vmatpush1.bf16.msra.mxu0 0
      %596 = vmatprep.subr.bf16.mxu0 0
      %597 = vmatpush1.bf16.msra.mxu0 0
      %598 = vmatprep.subr.bf16.mxu0 0
      %599 = vmatpush1.bf16.msra.mxu0 0
      %600 = vmatprep.subr.bf16.mxu0 0
      %601 = vmatpush1.bf16.msra.mxu0 0
      %602 = vmatprep.subr.bf16.mxu0 0
      %603 = vmatpush1.bf16.msra.mxu0 0
      %604 = vmatprep.subr.bf16.mxu0 0
      %605 = vmatpush1.bf16.msra.mxu0 0
      %606 = vmatprep.subr.bf16.mxu0 0
      %607 = vmatpush1.bf16.msra.mxu0 0
      %608 = vmatprep.subr.bf16.mxu0 0
      %609 = vmatpush1.bf16.msra.mxu0 0
      %610 = vmatprep.subr.bf16.mxu0 0
      %611 = vmatpush1.bf16.msra.mxu0 0
      %612 = vmatprep.subr.bf16.mxu0 0
      %613 = vmatpush1.bf16.msra.mxu0 0
      %614 = vmatprep.subr.bf16.mxu0 0
      %615 = vmatpush1.bf16.msra.mxu0 0
      %616 = vmatprep.subr.bf16.mxu0 0
      %617 = vmatpush1.bf16.msra.mxu0 0
      %618 = vmatprep.subr.bf16.mxu0 0
      %619 = vmatpush1.bf16.msra.mxu0 0
      %620 = vmatprep.mubr.bf16.mxu0 0
      %621 = vmatmul.mubr.bf16.gmra.mrb[0].mxu0 %v565
      %v622 = vpop.f32.mrb[0].mxu0
      %v623 = vadd.f32 %v436, %v622
      %v624 = vpop.f32.mrb[0].mxu0
      %v625 = vadd.f32 %v436, %v624
      %v626 = vpop.f32.mrb[0].mxu0
      %v627 = vadd.f32 %v441, %v626
      %v628 = vpop.f32.mrb[0].mxu0
      %v629 = vadd.f32 %v441, %v628
      %630 = vmatprep.mubr.bf16.mxu0 0
      %631 = vmatmul.mubr.bf16.gmra.mrb[0].mxu0 %v568
      %v632 = vpop.f32.mrb[0].mxu0
      %v633 = vadd.f32 %v446, %v632
      %v634 = vpop.f32.mrb[0].mxu0
      %v635 = vadd.f32 %v446, %v634
      %v636 = vpop.f32.mrb[0].mxu0
      %v637 = vadd.f32 %v451, %v636
      %v638 = vpop.f32.mrb[0].mxu0
      %v639 = vadd.f32 %v451, %v638
      %640 = vmatprep.mubr.bf16.mxu0 0
      %641 = vmatmul.mubr.bf16.gmra.mrb[0].mxu0 %v571
      %v642 = vpop.f32.mrb[0].mxu0
      %v643 = vadd.f32 %v456, %v642
      %v644 = vpop.f32.mrb[0].mxu0
      %v645 = vadd.f32 %v456, %v644
      %v646 = vpop.f32.mrb[0].mxu0
      %v647 = vadd.f32 %v461, %v646
      %v648 = vpop.f32.mrb[0].mxu0
      %v649 = vadd.f32 %v461, %v648
      %650 = vmatprep.mubr.bf16.mxu0 0
      %651 = vmatmul.mubr.bf16.gmra.mrb[0].mxu0 %v574
      %v652 = vpop.f32.mrb[0].mxu0
      %v653 = vadd.f32 %v466, %v652
      %v654 = vpop.f32.mrb[0].mxu0
      %v655 = vadd.f32 %v466, %v654
      %v656 = vpop.f32.mrb[0].mxu0
      %v657 = vadd.f32 %v471, %v656
      %v658 = vpop.f32.mrb[0].mxu0
      %v659 = vadd.f32 %v471, %v658
      %660 = vmatprep.mubr.bf16.mxu0 0
      %661 = vmatmul.mubr.bf16.gmra.mrb[0].mxu0 %v577
      %v662 = vpop.f32.mrb[0].mxu0
      %v663 = vadd.f32 %v476, %v662
      %v664 = vpop.f32.mrb[0].mxu0
      %v665 = vadd.f32 %v476, %v664
      %v666 = vpop.f32.mrb[0].mxu0
      %v667 = vadd.f32 %v481, %v666
      %v668 = vpop.f32.mrb[0].mxu0
      %v669 = vadd.f32 %v481, %v668
      %670 = vmatprep.mubr.bf16.mxu0 0
      %671 = vmatmul.mubr.bf16.gmra.mrb[0].mxu0 %v580
      %v672 = vpop.f32.mrb[0].mxu0
      %v673 = vadd.f32 %v486, %v672
      %v674 = vpop.f32.mrb[0].mxu0
      %v675 = vadd.f32 %v486, %v674
      %v676 = vpop.f32.mrb[0].mxu0
      %v677 = vadd.f32 %v491, %v676
      %v678 = vpop.f32.mrb[0].mxu0
      %v679 = vadd.f32 %v491, %v678
      %680 = vmatprep.mubr.bf16.mxu0 0
      %681 = vmatmul.mubr.bf16.gmra.mrb[0].mxu0 %v583
      %v682 = vpop.f32.mrb[0].mxu0
      %v683 = vadd.f32 %v496, %v682
      %v684 = vpop.f32.mrb[0].mxu0
      %v685 = vadd.f32 %v496, %v684
      %v686 = vpop.f32.mrb[0].mxu0
      %v687 = vadd.f32 %v501, %v686
      %v688 = vpop.f32.mrb[0].mxu0
      %v689 = vadd.f32 %v501, %v688
      %690 = vmatprep.mubr.bf16.mxu0 0
      %691 = vmatmul.mubr.bf16.gmra.mrb[0].mxu0 %v586
      %v692 = vpop.f32.mrb[0].mxu0
      %v693 = vadd.f32 %v506, %v692
      %v694 = vpop.f32.mrb[0].mxu0
      %v695 = vadd.f32 %v506, %v694
      %v696 = vpop.f32.mrb[0].mxu0
      %v697 = vadd.f32 %v511, %v696
      %v698 = vpop.f32.mrb[0].mxu0
      %v699 = vadd.f32 %v511, %v698
      %700 = vdwg.mxu0
      %v701 = vmax.f32 %v623, 0.0
      %v702 = vmax.f32 %v625, 0.0
      %v703 = vmax.f32 %v627, 0.0
      %v704 = vmax.f32 %v629, 0.0
      %v705 = vmax.f32 %v633, 0.0
      %v706 = vmax.f32 %v635, 0.0
      %v707 = vmax.f32 %v637, 0.0
      %v708 = vmax.f32 %v639, 0.0
      %v709 = vmax.f32 %v643, 0.0
      %v710 = vmax.f32 %v645, 0.0
      %v711 = vmax.f32 %v647, 0.0
      %v712 = vmax.f32 %v649, 0.0
      %v713 = vmax.f32 %v653, 0.0
      %v714 = vmax.f32 %v655, 0.0
      %v715 = vmax.f32 %v657, 0.0
      %v716 = vmax.f32 %v659, 0.0
      %v717 = vmax.f32 %v663, 0.0
      %v718 = vmax.f32 %v665, 0.0
      %v719 = vmax.f32 %v667, 0.0
      %v720 = vmax.f32 %v669, 0.0
      %v721 = vmax.f32 %v673, 0.0
      %v722 = vmax.f32 %v675, 0.0
      %v723 = vmax.f32 %v677, 0.0
      %v724 = vmax.f32 %v679, 0.0
      %v725 = vmax.f32 %v683, 0.0
      %v726 = vmax.f32 %v685, 0.0
      %v727 = vmax.f32 %v687, 0.0
      %v728 = vmax.f32 %v689, 0.0
      %v729 = vmax.f32 %v693, 0.0
      %v730 = vmax.f32 %v695, 0.0
      %v731 = vmax.f32 %v697, 0.0
      %v732 = vmax.f32 %v699, 0.0
      %v733 = vpack.c.bf16 %v703, %v701
      %v734 = vpack.c.bf16 %v704, %v702
      %v735 = vpack.c.bf16 %v707, %v705
      %v736 = vpack.c.bf16 %v708, %v706
      %v737 = vpack.c.bf16 %v711, %v709
      %v738 = vpack.c.bf16 %v712, %v710
      %v739 = vpack.c.bf16 %v715, %v713
      %v740 = vpack.c.bf16 %v716, %v714
      %v741 = vpack.c.bf16 %v719, %v717
      %v742 = vpack.c.bf16 %v720, %v718
      %v743 = vpack.c.bf16 %v723, %v721
      %v744 = vpack.c.bf16 %v724, %v722
      %v745 = vpack.c.bf16 %v727, %v725
      %v746 = vpack.c.bf16 %v728, %v726
      %v747 = vpack.c.bf16 %v731, %v729
      %v748 = vpack.c.bf16 %v732, %v730
      %750 = vset.pattern.permute.xlu0 0
      %751 = vperm.xlu0 %750, %v423
      %v752 = vpop.permute.xlu0 %751
      %755 = vset.pattern.permute.xlu0 0
      %756 = vperm.xlu0 %755, %v424
      %v757 = vpop.permute.xlu0 %756
      %760 = vset.pattern.permute.xlu0 0
      %761 = vperm.xlu0 %760, %v425
      %v762 = vpop.permute.xlu0 %761
      %765 = vset.pattern.permute.xlu0 0
      %766 = vperm.xlu0 %765, %v426
      %v767 = vpop.permute.xlu0 %766
      %v773 = vunpack.c.l.b16 %v383
      %v774 = vunpack.c.l.b16 %v384
      %v775 = vunpack.c.l.b16 %v385
      %v776 = vunpack.c.l.b16 %v386
      %v777 = vpack.c.b16 %v774, %v773
      %v778 = vpack.c.b16 %v776, %v775
      %781 = vmatprep.subr.bf16.mxu0 %v734
      %782 = vmatpush1.bf16.msra.mxu0 %v733
      %783 = vmatprep.subr.bf16.mxu0 %v736
      %784 = vmatpush1.bf16.msra.mxu0 %v735
      %785 = vmatprep.subr.bf16.mxu0 %v738
      %786 = vmatpush1.bf16.msra.mxu0 %v737
      %787 = vmatprep.subr.bf16.mxu0 %v740
      %788 = vmatpush1.bf16.msra.mxu0 %v739
      %789 = vmatprep.subr.bf16.mxu0 %v742
      %790 = vmatpush1.bf16.msra.mxu0 %v741
      %791 = vmatprep.subr.bf16.mxu0 %v744
      %792 = vmatpush1.bf16.msra.mxu0 %v743
      %793 = vmatprep.subr.bf16.mxu0 %v746
      %794 = vmatpush1.bf16.msra.mxu0 %v745
      %795 = vmatprep.subr.bf16.mxu0 %v748
      %796 = vmatpush1.bf16.msra.mxu0 %v747
      %797 = vmatprep.subr.bf16.mxu0 0
      %798 = vmatpush1.bf16.msra.mxu0 0
      %799 = vmatprep.subr.bf16.mxu0 0
      %800 = vmatpush1.bf16.msra.mxu0 0
      %801 = vmatprep.subr.bf16.mxu0 0
      %802 = vmatpush1.bf16.msra.mxu0 0
      %803 = vmatprep.subr.bf16.mxu0 0
      %804 = vmatpush1.bf16.msra.mxu0 0
      %805 = vmatprep.subr.bf16.mxu0 0
      %806 = vmatpush1.bf16.msra.mxu0 0
      %807 = vmatprep.subr.bf16.mxu0 0
      %808 = vmatpush1.bf16.msra.mxu0 0
      %809 = vmatprep.subr.bf16.mxu0 0
      %810 = vmatpush1.bf16.msra.mxu0 0
      %811 = vmatprep.subr.bf16.mxu0 0
      %812 = vmatpush1.bf16.msra.mxu0 0
      %813 = vmatprep.mubr.bf16.mxu0 0
      %814 = vmatmul.mubr.bf16.gmra.mrb[0].mxu0 %v777
      %v815 = vpop.f32.mrb[0].mxu0
      %v816 = vadd.f32 %v752, %v815
      %v817 = vpop.f32.mrb[0].mxu0
      %v818 = vadd.f32 %v752, %v817
      %v819 = vpop.f32.mrb[0].mxu0
      %v820 = vadd.f32 %v757, %v819
      %v821 = vpop.f32.mrb[0].mxu0
      %v822 = vadd.f32 %v757, %v821
      %823 = vmatprep.mubr.bf16.mxu0 0
      %824 = vmatmul.mubr.bf16.gmra.mrb[0].mxu0 %v778
      %v825 = vpop.f32.mrb[0].mxu0
      %v826 = vadd.f32 %v762, %v825
      %v827 = vpop.f32.mrb[0].mxu0
      %v828 = vadd.f32 %v762, %v827
      %v829 = vpop.f32.mrb[0].mxu0
      %v830 = vadd.f32 %v767, %v829
      %v831 = vpop.f32.mrb[0].mxu0
      %v832 = vadd.f32 %v767, %v831
      %833 = vdwg.mxu0
      %v834 = vmax.f32 %v816, 0.0
      %v835 = vmax.f32 %v818, 0.0
      %v836 = vmax.f32 %v820, 0.0
      %v837 = vmax.f32 %v822, 0.0
      %v838 = vmax.f32 %v826, 0.0
      %v839 = vmax.f32 %v828, 0.0
      %v840 = vmax.f32 %v830, 0.0
      %v841 = vmax.f32 %v832, 0.0
      %v842 = vpack.c.bf16 %v836, %v834
      %v843 = vpack.c.bf16 %v837, %v835
      %v844 = vpack.c.bf16 %v840, %v838
      %v845 = vpack.c.bf16 %v841, %v839
      %v846 = vld [vmem:[%s357] sm:$0xff]
      %v847 = vld [vmem:[%s357 + $0x8] sm:$0xff]
      %v848 = vld [vmem:[%s357 + $0x10] sm:$0xff]
      %v849 = vld [vmem:[%s357 + $0x18] sm:$0xff]
      %v850 = vld [vmem:[%s357 + $0x20] sm:$0xff]
      %v851 = vld [vmem:[%s357 + $0x28] sm:$0xff]
      %v852 = vld [vmem:[%s357 + $0x30] sm:$0xff]
      %v853 = vld [vmem:[%s357 + $0x38] sm:$0xff]
      %v854 = vld [vmem:[%s357 + $0x40] sm:$0xff]
      %v855 = vld [vmem:[%s357 + $0x48] sm:$0xff]
      %v856 = vld [vmem:[%s357 + $0x50] sm:$0xff]
      %v857 = vld [vmem:[%s357 + $0x58] sm:$0xff]
      %v858 = vld [vmem:[%s357 + $0x60] sm:$0xff]
      %v859 = vld [vmem:[%s357 + $0x68] sm:$0xff]
      %v860 = vld [vmem:[%s357 + $0x70] sm:$0xff]
      %v861 = vld [vmem:[%s357 + $0x78] sm:$0xff]
      %863 = vset.pattern.permute.xlu0 0
      %864 = vperm.xlu0 %863, %v846
      %v865 = vpop.permute.xlu0 %864
      %868 = vset.pattern.permute.xlu0 0
      %869 = vperm.xlu0 %868, %v847
      %v870 = vpop.permute.xlu0 %869
      %873 = vset.pattern.permute.xlu0 0
      %874 = vperm.xlu0 %873, %v848
      %v875 = vpop.permute.xlu0 %874
      %878 = vset.pattern.permute.xlu0 0
      %879 = vperm.xlu0 %878, %v849
      %v880 = vpop.permute.xlu0 %879
      %883 = vset.pattern.permute.xlu0 0
      %884 = vperm.xlu0 %883, %v850
      %v885 = vpop.permute.xlu0 %884
      %888 = vset.pattern.permute.xlu0 0
      %889 = vperm.xlu0 %888, %v851
      %v890 = vpop.permute.xlu0 %889
      %893 = vset.pattern.permute.xlu0 0
      %894 = vperm.xlu0 %893, %v852
      %v895 = vpop.permute.xlu0 %894
      %898 = vset.pattern.permute.xlu0 0
      %899 = vperm.xlu0 %898, %v853
      %v900 = vpop.permute.xlu0 %899
      %903 = vset.pattern.permute.xlu0 0
      %904 = vperm.xlu0 %903, %v854
      %v905 = vpop.permute.xlu0 %904
      %908 = vset.pattern.permute.xlu0 0
      %909 = vperm.xlu0 %908, %v855
      %v910 = vpop.permute.xlu0 %909
      %913 = vset.pattern.permute.xlu0 0
      %914 = vperm.xlu0 %913, %v856
      %v915 = vpop.permute.xlu0 %914
      %918 = vset.pattern.permute.xlu0 0
      %919 = vperm.xlu0 %918, %v857
      %v920 = vpop.permute.xlu0 %919
      %923 = vset.pattern.permute.xlu0 0
      %924 = vperm.xlu0 %923, %v858
      %v925 = vpop.permute.xlu0 %924
      %928 = vset.pattern.permute.xlu0 0
      %929 = vperm.xlu0 %928, %v859
      %v930 = vpop.permute.xlu0 %929
      %933 = vset.pattern.permute.xlu0 0
      %934 = vperm.xlu0 %933, %v860
      %v935 = vpop.permute.xlu0 %934
      %938 = vset.pattern.permute.xlu0 0
      %939 = vperm.xlu0 %938, %v861
      %v940 = vpop.permute.xlu0 %939
      %v958 = vunpack.c.l.b16 %v387
      %v959 = vunpack.c.l.b16 %v388
      %v960 = vunpack.c.l.b16 %v389
      %v961 = vunpack.c.l.b16 %v390
      %v962 = vunpack.c.l.b16 %v391
      %v963 = vunpack.c.l.b16 %v392
      %v964 = vunpack.c.l.b16 %v393
      %v965 = vunpack.c.l.b16 %v394
      %v966 = vunpack.c.l.b16 %v395
      %v967 = vunpack.c.l.b16 %v396
      %v968 = vunpack.c.l.b16 %v397
      %v969 = vunpack.c.l.b16 %v398
      %v970 = vunpack.c.l.b16 %v399
      %v971 = vunpack.c.l.b16 %v400
      %v972 = vunpack.c.l.b16 %v401
      %v973 = vunpack.c.l.b16 %v402
      %v974 = vpack.c.b16 %v959, %v958
      %v975 = vpack.c.b16 %v961, %v960
      %v976 = vpack.c.b16 %v963, %v962
      %v977 = vpack.c.b16 %v965, %v964
      %v978 = vpack.c.b16 %v967, %v966
      %v979 = vpack.c.b16 %v969, %v968
      %v980 = vpack.c.b16 %v971, %v970
      %v981 = vpack.c.b16 %v973, %v972
      %vm982 = vcmask 261120
      %v984 = vsel %vm982, %v974, 0
      %v987 = vsel %vm982, %v975, 0
      %v990 = vsel %vm982, %v976, 0
      %v993 = vsel %vm982, %v977, 0
      %v996 = vsel %vm982, %v978, 0
      %v999 = vsel %vm982, %v979, 0
      %v1002 = vsel %vm982, %v980, 0
      %v1005 = vsel %vm982, %v981, 0
      %1007 = vmatprep.subr.bf16.mxu0 %v843
      %1008 = vmatpush1.bf16.msra.mxu0 %v842
      %1009 = vmatprep.subr.bf16.mxu0 %v845
      %1010 = vmatpush1.bf16.msra.mxu0 %v844
      %1011 = vmatprep.subr.bf16.mxu0 0
      %1012 = vmatpush1.bf16.msra.mxu0 0
      %1013 = vmatprep.subr.bf16.mxu0 0
      %1014 = vmatpush1.bf16.msra.mxu0 0
      %1015 = vmatprep.subr.bf16.mxu0 0
      %1016 = vmatpush1.bf16.msra.mxu0 0
      %1017 = vmatprep.subr.bf16.mxu0 0
      %1018 = vmatpush1.bf16.msra.mxu0 0
      %1019 = vmatprep.subr.bf16.mxu0 0
      %1020 = vmatpush1.bf16.msra.mxu0 0
      %1021 = vmatprep.subr.bf16.mxu0 0
      %1022 = vmatpush1.bf16.msra.mxu0 0
      %1023 = vmatprep.subr.bf16.mxu0 0
      %1024 = vmatpush1.bf16.msra.mxu0 0
      %1025 = vmatprep.subr.bf16.mxu0 0
      %1026 = vmatpush1.bf16.msra.mxu0 0
      %1027 = vmatprep.subr.bf16.mxu0 0
      %1028 = vmatpush1.bf16.msra.mxu0 0
      %1029 = vmatprep.subr.bf16.mxu0 0
      %1030 = vmatpush1.bf16.msra.mxu0 0
      %1031 = vmatprep.subr.bf16.mxu0 0
      %1032 = vmatpush1.bf16.msra.mxu0 0
      %1033 = vmatprep.subr.bf16.mxu0 0
      %1034 = vmatpush1.bf16.msra.mxu0 0
      %1035 = vmatprep.subr.bf16.mxu0 0
      %1036 = vmatpush1.bf16.msra.mxu0 0
      %1037 = vmatprep.subr.bf16.mxu0 0
      %1038 = vmatpush1.bf16.msra.mxu0 0
      %1039 = vmatprep.mubr.bf16.mxu0 0
      %1040 = vmatmul.mubr.bf16.gmra.mrb[0].mxu0 %v984
      %v1041 = vpop.f32.mrb[0].mxu0
      %v1042 = vadd.f32 %v865, %v1041
      %v1043 = vpop.f32.mrb[0].mxu0
      %v1044 = vadd.f32 %v865, %v1043
      %v1045 = vpop.f32.mrb[0].mxu0
      %v1046 = vadd.f32 %v870, %v1045
      %v1047 = vpop.f32.mrb[0].mxu0
      %v1048 = vadd.f32 %v870, %v1047
      %1049 = vmatprep.mubr.bf16.mxu0 0
      %1050 = vmatmul.mubr.bf16.gmra.mrb[0].mxu0 %v987
      %v1051 = vpop.f32.mrb[0].mxu0
      %v1052 = vadd.f32 %v875, %v1051
      %v1053 = vpop.f32.mrb[0].mxu0
      %v1054 = vadd.f32 %v875, %v1053
      %v1055 = vpop.f32.mrb[0].mxu0
      %v1056 = vadd.f32 %v880, %v1055
      %v1057 = vpop.f32.mrb[0].mxu0
      %v1058 = vadd.f32 %v880, %v1057
      %1059 = vmatprep.mubr.bf16.mxu0 0
      %1060 = vmatmul.mubr.bf16.gmra.mrb[0].mxu0 %v990
      %v1061 = vpop.f32.mrb[0].mxu0
      %v1062 = vadd.f32 %v885, %v1061
      %v1063 = vpop.f32.mrb[0].mxu0
      %v1064 = vadd.f32 %v885, %v1063
      %v1065 = vpop.f32.mrb[0].mxu0
      %v1066 = vadd.f32 %v890, %v1065
      %v1067 = vpop.f32.mrb[0].mxu0
      %v1068 = vadd.f32 %v890, %v1067
      %1069 = vmatprep.mubr.bf16.mxu0 0
      %1070 = vmatmul.mubr.bf16.gmra.mrb[0].mxu0 %v993
      %v1071 = vpop.f32.mrb[0].mxu0
      %v1072 = vadd.f32 %v895, %v1071
      %v1073 = vpop.f32.mrb[0].mxu0
      %v1074 = vadd.f32 %v895, %v1073
      %v1075 = vpop.f32.mrb[0].mxu0
      %v1076 = vadd.f32 %v900, %v1075
      %v1077 = vpop.f32.mrb[0].mxu0
      %v1078 = vadd.f32 %v900, %v1077
      %1079 = vmatprep.mubr.bf16.mxu0 0
      %1080 = vmatmul.mubr.bf16.gmra.mrb[0].mxu0 %v996
      %v1081 = vpop.f32.mrb[0].mxu0
      %v1082 = vadd.f32 %v905, %v1081
      %v1083 = vpop.f32.mrb[0].mxu0
      %v1084 = vadd.f32 %v905, %v1083
      %v1085 = vpop.f32.mrb[0].mxu0
      %v1086 = vadd.f32 %v910, %v1085
      %v1087 = vpop.f32.mrb[0].mxu0
      %v1088 = vadd.f32 %v910, %v1087
      %1089 = vmatprep.mubr.bf16.mxu0 0
      %1090 = vmatmul.mubr.bf16.gmra.mrb[0].mxu0 %v999
      %v1091 = vpop.f32.mrb[0].mxu0
      %v1092 = vadd.f32 %v915, %v1091
      %v1093 = vpop.f32.mrb[0].mxu0
      %v1094 = vadd.f32 %v915, %v1093
      %v1095 = vpop.f32.mrb[0].mxu0
      %v1096 = vadd.f32 %v920, %v1095
      %v1097 = vpop.f32.mrb[0].mxu0
      %v1098 = vadd.f32 %v920, %v1097
      %1099 = vmatprep.mubr.bf16.mxu0 0
      %1100 = vmatmul.mubr.bf16.gmra.mrb[0].mxu0 %v1002
      %v1101 = vpop.f32.mrb[0].mxu0
      %v1102 = vadd.f32 %v925, %v1101
      %v1103 = vpop.f32.mrb[0].mxu0
      %v1104 = vadd.f32 %v925, %v1103
      %v1105 = vpop.f32.mrb[0].mxu0
      %v1106 = vadd.f32 %v930, %v1105
      %v1107 = vpop.f32.mrb[0].mxu0
      %v1108 = vadd.f32 %v930, %v1107
      %1109 = vmatprep.mubr.bf16.mxu0 0
      %1110 = vmatmul.mubr.bf16.gmra.mrb[0].mxu0 %v1005
      %v1111 = vpop.f32.mrb[0].mxu0
      %v1112 = vadd.f32 %v935, %v1111
      %v1113 = vpop.f32.mrb[0].mxu0
      %v1114 = vadd.f32 %v935, %v1113
      %v1115 = vpop.f32.mrb[0].mxu0
      %v1116 = vadd.f32 %v940, %v1115
      %v1117 = vpop.f32.mrb[0].mxu0
      %v1118 = vadd.f32 %v940, %v1117
      %1119 = vdwg.mxu0
      %v1120 = vmax.f32 %v1042, 0.0
      %v1121 = vmax.f32 %v1044, 0.0
      %v1122 = vmax.f32 %v1046, 0.0
      %v1123 = vmax.f32 %v1048, 0.0
      %v1124 = vmax.f32 %v1052, 0.0
      %v1125 = vmax.f32 %v1054, 0.0
      %v1126 = vmax.f32 %v1056, 0.0
      %v1127 = vmax.f32 %v1058, 0.0
      %v1128 = vmax.f32 %v1062, 0.0
      %v1129 = vmax.f32 %v1064, 0.0
      %v1130 = vmax.f32 %v1066, 0.0
      %v1131 = vmax.f32 %v1068, 0.0
      %v1132 = vmax.f32 %v1072, 0.0
      %v1133 = vmax.f32 %v1074, 0.0
      %v1134 = vmax.f32 %v1076, 0.0
      %v1135 = vmax.f32 %v1078, 0.0
      %v1136 = vmax.f32 %v1082, 0.0
      %v1137 = vmax.f32 %v1084, 0.0
      %v1138 = vmax.f32 %v1086, 0.0
      %v1139 = vmax.f32 %v1088, 0.0
      %v1140 = vmax.f32 %v1092, 0.0
      %v1141 = vmax.f32 %v1094, 0.0
      %v1142 = vmax.f32 %v1096, 0.0
      %v1143 = vmax.f32 %v1098, 0.0
      %v1144 = vmax.f32 %v1102, 0.0
      %v1145 = vmax.f32 %v1104, 0.0
      %v1146 = vmax.f32 %v1106, 0.0
      %v1147 = vmax.f32 %v1108, 0.0
      %v1148 = vmax.f32 %v1112, 0.0
      %v1149 = vmax.f32 %v1114, 0.0
      %v1150 = vmax.f32 %v1116, 0.0
      %v1151 = vmax.f32 %v1118, 0.0
      %v1152 = vpack.c.bf16 %v1122, %v1120
      %v1153 = vpack.c.bf16 %v1123, %v1121
      %v1154 = vpack.c.bf16 %v1126, %v1124
      %v1155 = vpack.c.bf16 %v1127, %v1125
      %v1156 = vpack.c.bf16 %v1130, %v1128
      %v1157 = vpack.c.bf16 %v1131, %v1129
      %v1158 = vpack.c.bf16 %v1134, %v1132
      %v1159 = vpack.c.bf16 %v1135, %v1133
      %v1160 = vpack.c.bf16 %v1138, %v1136
      %v1161 = vpack.c.bf16 %v1139, %v1137
      %v1162 = vpack.c.bf16 %v1142, %v1140
      %v1163 = vpack.c.bf16 %v1143, %v1141
      %v1164 = vpack.c.bf16 %v1146, %v1144
      %v1165 = vpack.c.bf16 %v1147, %v1145
      %v1166 = vpack.c.bf16 %v1150, %v1148
      %v1167 = vpack.c.bf16 %v1151, %v1149
      %1169 = vset.pattern.permute.xlu0 0
      %1170 = vperm.xlu0 %1169, %v427
      %v1171 = vpop.permute.xlu0 %1170
      %1174 = vset.pattern.permute.xlu0 0
      %1175 = vperm.xlu0 %1174, %v428
      %v1176 = vpop.permute.xlu0 %1175
      %1179 = vset.pattern.permute.xlu0 0
      %1180 = vperm.xlu0 %1179, %v429
      %v1181 = vpop.permute.xlu0 %1180
      %1184 = vset.pattern.permute.xlu0 0
      %1185 = vperm.xlu0 %1184, %v430
      %v1186 = vpop.permute.xlu0 %1185
      %v1192 = vunpack.c.l.b16 %v403
      %v1193 = vunpack.c.l.b16 %v404
      %v1194 = vunpack.c.l.b16 %v405
      %v1195 = vunpack.c.l.b16 %v406
      %v1196 = vpack.c.b16 %v1193, %v1192
      %v1197 = vpack.c.b16 %v1195, %v1194
      %1200 = vmatprep.subr.bf16.mxu0 %v1153
      %1201 = vmatpush1.bf16.msra.mxu0 %v1152
      %1202 = vmatprep.subr.bf16.mxu0 %v1155
      %1203 = vmatpush1.bf16.msra.mxu0 %v1154
      %1204 = vmatprep.subr.bf16.mxu0 %v1157
      %1205 = vmatpush1.bf16.msra.mxu0 %v1156
      %1206 = vmatprep.subr.bf16.mxu0 %v1159
      %1207 = vmatpush1.bf16.msra.mxu0 %v1158
      %1208 = vmatprep.subr.bf16.mxu0 %v1161
      %1209 = vmatpush1.bf16.msra.mxu0 %v1160
      %1210 = vmatprep.subr.bf16.mxu0 %v1163
      %1211 = vmatpush1.bf16.msra.mxu0 %v1162
      %1212 = vmatprep.subr.bf16.mxu0 %v1165
      %1213 = vmatpush1.bf16.msra.mxu0 %v1164
      %1214 = vmatprep.subr.bf16.mxu0 %v1167
      %1215 = vmatpush1.bf16.msra.mxu0 %v1166
      %1216 = vmatprep.subr.bf16.mxu0 0
      %1217 = vmatpush1.bf16.msra.mxu0 0
      %1218 = vmatprep.subr.bf16.mxu0 0
      %1219 = vmatpush1.bf16.msra.mxu0 0
      %1220 = vmatprep.subr.bf16.mxu0 0
      %1221 = vmatpush1.bf16.msra.mxu0 0
      %1222 = vmatprep.subr.bf16.mxu0 0
      %1223 = vmatpush1.bf16.msra.mxu0 0
      %1224 = vmatprep.subr.bf16.mxu0 0
      %1225 = vmatpush1.bf16.msra.mxu0 0
      %1226 = vmatprep.subr.bf16.mxu0 0
      %1227 = vmatpush1.bf16.msra.mxu0 0
      %1228 = vmatprep.subr.bf16.mxu0 0
      %1229 = vmatpush1.bf16.msra.mxu0 0
      %1230 = vmatprep.subr.bf16.mxu0 0
      %1231 = vmatpush1.bf16.msra.mxu0 0
      %1232 = vmatprep.mubr.bf16.mxu0 0
      %1233 = vmatmul.mubr.bf16.gmra.mrb[0].mxu0 %v1196
      %v1234 = vpop.f32.mrb[0].mxu0
      %v1235 = vadd.f32 %v1171, %v1234
      %v1236 = vpop.f32.mrb[0].mxu0
      %v1237 = vadd.f32 %v1171, %v1236
      %v1238 = vpop.f32.mrb[0].mxu0
      %v1239 = vadd.f32 %v1176, %v1238
      %v1240 = vpop.f32.mrb[0].mxu0
      %v1241 = vadd.f32 %v1176, %v1240
      %1242 = vmatprep.mubr.bf16.mxu0 0
      %1243 = vmatmul.mubr.bf16.gmra.mrb[0].mxu0 %v1197
      %v1244 = vpop.f32.mrb[0].mxu0
      %v1245 = vadd.f32 %v1181, %v1244
      %v1246 = vpop.f32.mrb[0].mxu0
      %v1247 = vadd.f32 %v1181, %v1246
      %v1248 = vpop.f32.mrb[0].mxu0
      %v1249 = vadd.f32 %v1186, %v1248
      %v1250 = vpop.f32.mrb[0].mxu0
      %v1251 = vadd.f32 %v1186, %v1250
      %1252 = vdwg.mxu0
      %1253 = vst [vmem:[%s364] sm:$0xff] %v1235
      %1254 = vst [vmem:[%s364 + $0x8] sm:$0xff] %v1237
      %1255 = vst [vmem:[%s364 + $0x10] sm:$0xff] %v1239
      %1256 = vst [vmem:[%s364 + $0x18] sm:$0xff] %v1241
      %1257 = vst [vmem:[%s364 + $0x20] sm:$0xff] %v1245
      %1258 = vst [vmem:[%s364 + $0x28] sm:$0xff] %v1247
      %1259 = vst [vmem:[%s364 + $0x30] sm:$0xff] %v1249
      %1260 = vst [vmem:[%s364 + $0x38] sm:$0xff] %v1251
      %s1261 = scalar_lea.vmem %s350, 16
      %v1262 = vld [vmem:[%s1261] sm:$0xff]
      %v1263 = vld [vmem:[%s1261 + $0x8] sm:$0xff]
      %v1266 = vunpack.c.l.b16 %v1262
      %v1267 = vunpack.c.h.b16 %v1262
      %v1268 = vunpack.c.l.b16 %v1263
      %v1269 = vunpack.c.h.b16 %v1263
      %v1270 = vpack.c.b16 %v1268, %v1266
      %v1271 = vpack.c.b16 %v1269, %v1267
      %1274 = vmatprep.subr.bf16.mxu0 %v1271
      %1275 = vmatpush1.bf16.msra.mxu0 %v1270
      %1276 = vmatprep.subr.bf16.mxu0 0
      %1277 = vmatpush1.bf16.msra.mxu0 0
      %1278 = vmatprep.subr.bf16.mxu0 0
      %1279 = vmatpush1.bf16.msra.mxu0 0
      %1280 = vmatprep.subr.bf16.mxu0 0
      %1281 = vmatpush1.bf16.msra.mxu0 0
      %1282 = vmatprep.subr.bf16.mxu0 0
      %1283 = vmatpush1.bf16.msra.mxu0 0
      %1284 = vmatprep.subr.bf16.mxu0 0
      %1285 = vmatpush1.bf16.msra.mxu0 0
      %1286 = vmatprep.subr.bf16.mxu0 0
      %1287 = vmatpush1.bf16.msra.mxu0 0
      %1288 = vmatprep.subr.bf16.mxu0 0
      %1289 = vmatpush1.bf16.msra.mxu0 0
      %1290 = vmatprep.subr.bf16.mxu0 0
      %1291 = vmatpush1.bf16.msra.mxu0 0
      %1292 = vmatprep.subr.bf16.mxu0 0
      %1293 = vmatpush1.bf16.msra.mxu0 0
      %1294 = vmatprep.subr.bf16.mxu0 0
      %1295 = vmatpush1.bf16.msra.mxu0 0
      %1296 = vmatprep.subr.bf16.mxu0 0
      %1297 = vmatpush1.bf16.msra.mxu0 0
      %1298 = vmatprep.subr.bf16.mxu0 0
      %1299 = vmatpush1.bf16.msra.mxu0 0
      %1300 = vmatprep.subr.bf16.mxu0 0
      %1301 = vmatpush1.bf16.msra.mxu0 0
      %1302 = vmatprep.subr.bf16.mxu0 0
      %1303 = vmatpush1.bf16.msra.mxu0 0
      %1304 = vmatprep.subr.bf16.mxu0 0
      %1305 = vmatpush1.bf16.msra.mxu0 0
      %1306 = vmatprep.mubr.bf16.mxu0 0
      %1307 = vmatmul.mubr.bf16.gmra.mrb[0].mxu0 %v565
      %v1308 = vpop.f32.mrb[0].mxu0
      %v1309 = vadd.f32 %v436, %v1308
      %v1310 = vpop.f32.mrb[0].mxu0
      %v1311 = vadd.f32 %v436, %v1310
      %v1312 = vpop.f32.mrb[0].mxu0
      %v1313 = vadd.f32 %v441, %v1312
      %v1314 = vpop.f32.mrb[0].mxu0
      %v1315 = vadd.f32 %v441, %v1314
      %1316 = vmatprep.mubr.bf16.mxu0 0
      %1317 = vmatmul.mubr.bf16.gmra.mrb[0].mxu0 %v568
      %v1318 = vpop.f32.mrb[0].mxu0
      %v1319 = vadd.f32 %v446, %v1318
      %v1320 = vpop.f32.mrb[0].mxu0
      %v1321 = vadd.f32 %v446, %v1320
      %v1322 = vpop.f32.mrb[0].mxu0
      %v1323 = vadd.f32 %v451, %v1322
      %v1324 = vpop.f32.mrb[0].mxu0
      %v1325 = vadd.f32 %v451, %v1324
      %1326 = vmatprep.mubr.bf16.mxu0 0
      %1327 = vmatmul.mubr.bf16.gmra.mrb[0].mxu0 %v571
      %v1328 = vpop.f32.mrb[0].mxu0
      %v1329 = vadd.f32 %v456, %v1328
      %v1330 = vpop.f32.mrb[0].mxu0
      %v1331 = vadd.f32 %v456, %v1330
      %v1332 = vpop.f32.mrb[0].mxu0
      %v1333 = vadd.f32 %v461, %v1332
      %v1334 = vpop.f32.mrb[0].mxu0
      %v1335 = vadd.f32 %v461, %v1334
      %1336 = vmatprep.mubr.bf16.mxu0 0
      %1337 = vmatmul.mubr.bf16.gmra.mrb[0].mxu0 %v574
      %v1338 = vpop.f32.mrb[0].mxu0
      %v1339 = vadd.f32 %v466, %v1338
      %v1340 = vpop.f32.mrb[0].mxu0
      %v1341 = vadd.f32 %v466, %v1340
      %v1342 = vpop.f32.mrb[0].mxu0
      %v1343 = vadd.f32 %v471, %v1342
      %v1344 = vpop.f32.mrb[0].mxu0
      %v1345 = vadd.f32 %v471, %v1344
      %1346 = vmatprep.mubr.bf16.mxu0 0
      %1347 = vmatmul.mubr.bf16.gmra.mrb[0].mxu0 %v577
      %v1348 = vpop.f32.mrb[0].mxu0
      %v1349 = vadd.f32 %v476, %v1348
      %v1350 = vpop.f32.mrb[0].mxu0
      %v1351 = vadd.f32 %v476, %v1350
      %v1352 = vpop.f32.mrb[0].mxu0
      %v1353 = vadd.f32 %v481, %v1352
      %v1354 = vpop.f32.mrb[0].mxu0
      %v1355 = vadd.f32 %v481, %v1354
      %1356 = vmatprep.mubr.bf16.mxu0 0
      %1357 = vmatmul.mubr.bf16.gmra.mrb[0].mxu0 %v580
      %v1358 = vpop.f32.mrb[0].mxu0
      %v1359 = vadd.f32 %v486, %v1358
      %v1360 = vpop.f32.mrb[0].mxu0
      %v1361 = vadd.f32 %v486, %v1360
      %v1362 = vpop.f32.mrb[0].mxu0
      %v1363 = vadd.f32 %v491, %v1362
      %v1364 = vpop.f32.mrb[0].mxu0
      %v1365 = vadd.f32 %v491, %v1364
      %1366 = vmatprep.mubr.bf16.mxu0 0
      %1367 = vmatmul.mubr.bf16.gmra.mrb[0].mxu0 %v583
      %v1368 = vpop.f32.mrb[0].mxu0
      %v1369 = vadd.f32 %v496, %v1368
      %v1370 = vpop.f32.mrb[0].mxu0
      %v1371 = vadd.f32 %v496, %v1370
      %v1372 = vpop.f32.mrb[0].mxu0
      %v1373 = vadd.f32 %v501, %v1372
      %v1374 = vpop.f32.mrb[0].mxu0
      %v1375 = vadd.f32 %v501, %v1374
      %1376 = vmatprep.mubr.bf16.mxu0 0
      %1377 = vmatmul.mubr.bf16.gmra.mrb[0].mxu0 %v586
      %v1378 = vpop.f32.mrb[0].mxu0
      %v1379 = vadd.f32 %v506, %v1378
      %v1380 = vpop.f32.mrb[0].mxu0
      %v1381 = vadd.f32 %v506, %v1380
      %v1382 = vpop.f32.mrb[0].mxu0
      %v1383 = vadd.f32 %v511, %v1382
      %v1384 = vpop.f32.mrb[0].mxu0
      %v1385 = vadd.f32 %v511, %v1384
      %1386 = vdwg.mxu0
      %v1387 = vmax.f32 %v1309, 0.0
      %v1388 = vmax.f32 %v1311, 0.0
      %v1389 = vmax.f32 %v1313, 0.0
      %v1390 = vmax.f32 %v1315, 0.0
      %v1391 = vmax.f32 %v1319, 0.0
      %v1392 = vmax.f32 %v1321, 0.0
      %v1393 = vmax.f32 %v1323, 0.0
      %v1394 = vmax.f32 %v1325, 0.0
      %v1395 = vmax.f32 %v1329, 0.0
      %v1396 = vmax.f32 %v1331, 0.0
      %v1397 = vmax.f32 %v1333, 0.0
      %v1398 = vmax.f32 %v1335, 0.0
      %v1399 = vmax.f32 %v1339, 0.0
      %v1400 = vmax.f32 %v1341, 0.0
      %v1401 = vmax.f32 %v1343, 0.0
      %v1402 = vmax.f32 %v1345, 0.0
      %v1403 = vmax.f32 %v1349, 0.0
      %v1404 = vmax.f32 %v1351, 0.0
      %v1405 = vmax.f32 %v1353, 0.0
      %v1406 = vmax.f32 %v1355, 0.0
      %v1407 = vmax.f32 %v1359, 0.0
      %v1408 = vmax.f32 %v1361, 0.0
      %v1409 = vmax.f32 %v1363, 0.0
      %v1410 = vmax.f32 %v1365, 0.0
      %v1411 = vmax.f32 %v1369, 0.0
      %v1412 = vmax.f32 %v1371, 0.0
      %v1413 = vmax.f32 %v1373, 0.0
      %v1414 = vmax.f32 %v1375, 0.0
      %v1415 = vmax.f32 %v1379, 0.0
      %v1416 = vmax.f32 %v1381, 0.0
      %v1417 = vmax.f32 %v1383, 0.0
      %v1418 = vmax.f32 %v1385, 0.0
      %v1419 = vpack.c.bf16 %v1389, %v1387
      %v1420 = vpack.c.bf16 %v1390, %v1388
      %v1421 = vpack.c.bf16 %v1393, %v1391
      %v1422 = vpack.c.bf16 %v1394, %v1392
      %v1423 = vpack.c.bf16 %v1397, %v1395
      %v1424 = vpack.c.bf16 %v1398, %v1396
      %v1425 = vpack.c.bf16 %v1401, %v1399
      %v1426 = vpack.c.bf16 %v1402, %v1400
      %v1427 = vpack.c.bf16 %v1405, %v1403
      %v1428 = vpack.c.bf16 %v1406, %v1404
      %v1429 = vpack.c.bf16 %v1409, %v1407
      %v1430 = vpack.c.bf16 %v1410, %v1408
      %v1431 = vpack.c.bf16 %v1413, %v1411
      %v1432 = vpack.c.bf16 %v1414, %v1412
      %v1433 = vpack.c.bf16 %v1417, %v1415
      %v1434 = vpack.c.bf16 %v1418, %v1416
      %1435 = vmatprep.subr.bf16.mxu0 %v1420
      %1436 = vmatpush1.bf16.msra.mxu0 %v1419
      %1437 = vmatprep.subr.bf16.mxu0 %v1422
      %1438 = vmatpush1.bf16.msra.mxu0 %v1421
      %1439 = vmatprep.subr.bf16.mxu0 %v1424
      %1440 = vmatpush1.bf16.msra.mxu0 %v1423
      %1441 = vmatprep.subr.bf16.mxu0 %v1426
      %1442 = vmatpush1.bf16.msra.mxu0 %v1425
      %1443 = vmatprep.subr.bf16.mxu0 %v1428
      %1444 = vmatpush1.bf16.msra.mxu0 %v1427
      %1445 = vmatprep.subr.bf16.mxu0 %v1430
      %1446 = vmatpush1.bf16.msra.mxu0 %v1429
      %1447 = vmatprep.subr.bf16.mxu0 %v1432
      %1448 = vmatpush1.bf16.msra.mxu0 %v1431
      %1449 = vmatprep.subr.bf16.mxu0 %v1434
      %1450 = vmatpush1.bf16.msra.mxu0 %v1433
      %1451 = vmatprep.subr.bf16.mxu0 0
      %1452 = vmatpush1.bf16.msra.mxu0 0
      %1453 = vmatprep.subr.bf16.mxu0 0
      %1454 = vmatpush1.bf16.msra.mxu0 0
      %1455 = vmatprep.subr.bf16.mxu0 0
      %1456 = vmatpush1.bf16.msra.mxu0 0
      %1457 = vmatprep.subr.bf16.mxu0 0
      %1458 = vmatpush1.bf16.msra.mxu0 0
      %1459 = vmatprep.subr.bf16.mxu0 0
      %1460 = vmatpush1.bf16.msra.mxu0 0
      %1461 = vmatprep.subr.bf16.mxu0 0
      %1462 = vmatpush1.bf16.msra.mxu0 0
      %1463 = vmatprep.subr.bf16.mxu0 0
      %1464 = vmatpush1.bf16.msra.mxu0 0
      %1465 = vmatprep.subr.bf16.mxu0 0
      %1466 = vmatpush1.bf16.msra.mxu0 0
      %1467 = vmatprep.mubr.bf16.mxu0 0
      %1468 = vmatmul.mubr.bf16.gmra.mrb[0].mxu0 %v777
      %v1469 = vpop.f32.mrb[0].mxu0
      %v1470 = vadd.f32 %v752, %v1469
      %v1471 = vpop.f32.mrb[0].mxu0
      %v1472 = vadd.f32 %v752, %v1471
      %v1473 = vpop.f32.mrb[0].mxu0
      %v1474 = vadd.f32 %v757, %v1473
      %v1475 = vpop.f32.mrb[0].mxu0
      %v1476 = vadd.f32 %v757, %v1475
      %1477 = vmatprep.mubr.bf16.mxu0 0
      %1478 = vmatmul.mubr.bf16.gmra.mrb[0].mxu0 %v778
      %v1479 = vpop.f32.mrb[0].mxu0
      %v1480 = vadd.f32 %v762, %v1479
      %v1481 = vpop.f32.mrb[0].mxu0
      %v1482 = vadd.f32 %v762, %v1481
      %v1483 = vpop.f32.mrb[0].mxu0
      %v1484 = vadd.f32 %v767, %v1483
      %v1485 = vpop.f32.mrb[0].mxu0
      %v1486 = vadd.f32 %v767, %v1485
      %1487 = vdwg.mxu0
      %v1488 = vmax.f32 %v1470, 0.0
      %v1489 = vmax.f32 %v1472, 0.0
      %v1490 = vmax.f32 %v1474, 0.0
      %v1491 = vmax.f32 %v1476, 0.0
      %v1492 = vmax.f32 %v1480, 0.0
      %v1493 = vmax.f32 %v1482, 0.0
      %v1494 = vmax.f32 %v1484, 0.0
      %v1495 = vmax.f32 %v1486, 0.0
      %v1496 = vpack.c.bf16 %v1490, %v1488
      %v1497 = vpack.c.bf16 %v1491, %v1489
      %v1498 = vpack.c.bf16 %v1494, %v1492
      %v1499 = vpack.c.bf16 %v1495, %v1493
      %s1500 = scalar_lea.vmem %s357, 128
      %v1501 = vld [vmem:[%s1500] sm:$0xff]
      %v1502 = vld [vmem:[%s1500 + $0x8] sm:$0xff]
      %v1503 = vld [vmem:[%s1500 + $0x10] sm:$0xff]
      %v1504 = vld [vmem:[%s1500 + $0x18] sm:$0xff]
      %v1505 = vld [vmem:[%s1500 + $0x20] sm:$0xff]
      %v1506 = vld [vmem:[%s1500 + $0x28] sm:$0xff]
      %v1507 = vld [vmem:[%s1500 + $0x30] sm:$0xff]
      %v1508 = vld [vmem:[%s1500 + $0x38] sm:$0xff]
      %v1509 = vld [vmem:[%s1500 + $0x40] sm:$0xff]
      %v1510 = vld [vmem:[%s1500 + $0x48] sm:$0xff]
      %v1511 = vld [vmem:[%s1500 + $0x50] sm:$0xff]
      %v1512 = vld [vmem:[%s1500 + $0x58] sm:$0xff]
      %v1513 = vld [vmem:[%s1500 + $0x60] sm:$0xff]
      %v1514 = vld [vmem:[%s1500 + $0x68] sm:$0xff]
      %v1515 = vld [vmem:[%s1500 + $0x70] sm:$0xff]
      %v1516 = vld [vmem:[%s1500 + $0x78] sm:$0xff]
      %1518 = vset.pattern.permute.xlu0 0
      %1519 = vperm.xlu0 %1518, %v1501
      %v1520 = vpop.permute.xlu0 %1519
      %1523 = vset.pattern.permute.xlu0 0
      %1524 = vperm.xlu0 %1523, %v1502
      %v1525 = vpop.permute.xlu0 %1524
      %1528 = vset.pattern.permute.xlu0 0
      %1529 = vperm.xlu0 %1528, %v1503
      %v1530 = vpop.permute.xlu0 %1529
      %1533 = vset.pattern.permute.xlu0 0
      %1534 = vperm.xlu0 %1533, %v1504
      %v1535 = vpop.permute.xlu0 %1534
      %1538 = vset.pattern.permute.xlu0 0
      %1539 = vperm.xlu0 %1538, %v1505
      %v1540 = vpop.permute.xlu0 %1539
      %1543 = vset.pattern.permute.xlu0 0
      %1544 = vperm.xlu0 %1543, %v1506
      %v1545 = vpop.permute.xlu0 %1544
      %1548 = vset.pattern.permute.xlu0 0
      %1549 = vperm.xlu0 %1548, %v1507
      %v1550 = vpop.permute.xlu0 %1549
      %1553 = vset.pattern.permute.xlu0 0
      %1554 = vperm.xlu0 %1553, %v1508
      %v1555 = vpop.permute.xlu0 %1554
      %1558 = vset.pattern.permute.xlu0 0
      %1559 = vperm.xlu0 %1558, %v1509
      %v1560 = vpop.permute.xlu0 %1559
      %1563 = vset.pattern.permute.xlu0 0
      %1564 = vperm.xlu0 %1563, %v1510
      %v1565 = vpop.permute.xlu0 %1564
      %1568 = vset.pattern.permute.xlu0 0
      %1569 = vperm.xlu0 %1568, %v1511
      %v1570 = vpop.permute.xlu0 %1569
      %1573 = vset.pattern.permute.xlu0 0
      %1574 = vperm.xlu0 %1573, %v1512
      %v1575 = vpop.permute.xlu0 %1574
      %1578 = vset.pattern.permute.xlu0 0
      %1579 = vperm.xlu0 %1578, %v1513
      %v1580 = vpop.permute.xlu0 %1579
      %1583 = vset.pattern.permute.xlu0 0
      %1584 = vperm.xlu0 %1583, %v1514
      %v1585 = vpop.permute.xlu0 %1584
      %1588 = vset.pattern.permute.xlu0 0
      %1589 = vperm.xlu0 %1588, %v1515
      %v1590 = vpop.permute.xlu0 %1589
      %1593 = vset.pattern.permute.xlu0 0
      %1594 = vperm.xlu0 %1593, %v1516
      %v1595 = vpop.permute.xlu0 %1594
      %1597 = vmatprep.subr.bf16.mxu0 %v1497
      %1598 = vmatpush1.bf16.msra.mxu0 %v1496
      %1599 = vmatprep.subr.bf16.mxu0 %v1499
      %1600 = vmatpush1.bf16.msra.mxu0 %v1498
      %1601 = vmatprep.subr.bf16.mxu0 0
      %1602 = vmatpush1.bf16.msra.mxu0 0
      %1603 = vmatprep.subr.bf16.mxu0 0
      %1604 = vmatpush1.bf16.msra.mxu0 0
      %1605 = vmatprep.subr.bf16.mxu0 0
      %1606 = vmatpush1.bf16.msra.mxu0 0
      %1607 = vmatprep.subr.bf16.mxu0 0
      %1608 = vmatpush1.bf16.msra.mxu0 0
      %1609 = vmatprep.subr.bf16.mxu0 0
      %1610 = vmatpush1.bf16.msra.mxu0 0
      %1611 = vmatprep.subr.bf16.mxu0 0
      %1612 = vmatpush1.bf16.msra.mxu0 0
      %1613 = vmatprep.subr.bf16.mxu0 0
      %1614 = vmatpush1.bf16.msra.mxu0 0
      %1615 = vmatprep.subr.bf16.mxu0 0
      %1616 = vmatpush1.bf16.msra.mxu0 0
      %1617 = vmatprep.subr.bf16.mxu0 0
      %1618 = vmatpush1.bf16.msra.mxu0 0
      %1619 = vmatprep.subr.bf16.mxu0 0
      %1620 = vmatpush1.bf16.msra.mxu0 0
      %1621 = vmatprep.subr.bf16.mxu0 0
      %1622 = vmatpush1.bf16.msra.mxu0 0
      %1623 = vmatprep.subr.bf16.mxu0 0
      %1624 = vmatpush1.bf16.msra.mxu0 0
      %1625 = vmatprep.subr.bf16.mxu0 0
      %1626 = vmatpush1.bf16.msra.mxu0 0
      %1627 = vmatprep.subr.bf16.mxu0 0
      %1628 = vmatpush1.bf16.msra.mxu0 0
      %1629 = vmatprep.mubr.bf16.mxu0 0
      %1630 = vmatmul.mubr.bf16.gmra.mrb[0].mxu0 %v984
      %v1631 = vpop.f32.mrb[0].mxu0
      %v1632 = vadd.f32 %v1520, %v1631
      %v1633 = vpop.f32.mrb[0].mxu0
      %v1634 = vadd.f32 %v1520, %v1633
      %v1635 = vpop.f32.mrb[0].mxu0
      %v1636 = vadd.f32 %v1525, %v1635
      %v1637 = vpop.f32.mrb[0].mxu0
      %v1638 = vadd.f32 %v1525, %v1637
      %1639 = vmatprep.mubr.bf16.mxu0 0
      %1640 = vmatmul.mubr.bf16.gmra.mrb[0].mxu0 %v987
      %v1641 = vpop.f32.mrb[0].mxu0
      %v1642 = vadd.f32 %v1530, %v1641
      %v1643 = vpop.f32.mrb[0].mxu0
      %v1644 = vadd.f32 %v1530, %v1643
      %v1645 = vpop.f32.mrb[0].mxu0
      %v1646 = vadd.f32 %v1535, %v1645
      %v1647 = vpop.f32.mrb[0].mxu0
      %v1648 = vadd.f32 %v1535, %v1647
      %1649 = vmatprep.mubr.bf16.mxu0 0
      %1650 = vmatmul.mubr.bf16.gmra.mrb[0].mxu0 %v990
      %v1651 = vpop.f32.mrb[0].mxu0
      %v1652 = vadd.f32 %v1540, %v1651
      %v1653 = vpop.f32.mrb[0].mxu0
      %v1654 = vadd.f32 %v1540, %v1653
      %v1655 = vpop.f32.mrb[0].mxu0
      %v1656 = vadd.f32 %v1545, %v1655
      %v1657 = vpop.f32.mrb[0].mxu0
      %v1658 = vadd.f32 %v1545, %v1657
      %1659 = vmatprep.mubr.bf16.mxu0 0
      %1660 = vmatmul.mubr.bf16.gmra.mrb[0].mxu0 %v993
      %v1661 = vpop.f32.mrb[0].mxu0
      %v1662 = vadd.f32 %v1550, %v1661
      %v1663 = vpop.f32.mrb[0].mxu0
      %v1664 = vadd.f32 %v1550, %v1663
      %v1665 = vpop.f32.mrb[0].mxu0
      %v1666 = vadd.f32 %v1555, %v1665
      %v1667 = vpop.f32.mrb[0].mxu0
      %v1668 = vadd.f32 %v1555, %v1667
      %1669 = vmatprep.mubr.bf16.mxu0 0
      %1670 = vmatmul.mubr.bf16.gmra.mrb[0].mxu0 %v996
      %v1671 = vpop.f32.mrb[0].mxu0
      %v1672 = vadd.f32 %v1560, %v1671
      %v1673 = vpop.f32.mrb[0].mxu0
      %v1674 = vadd.f32 %v1560, %v1673
      %v1675 = vpop.f32.mrb[0].mxu0
      %v1676 = vadd.f32 %v1565, %v1675
      %v1677 = vpop.f32.mrb[0].mxu0
      %v1678 = vadd.f32 %v1565, %v1677
      %1679 = vmatprep.mubr.bf16.mxu0 0
      %1680 = vmatmul.mubr.bf16.gmra.mrb[0].mxu0 %v999
      %v1681 = vpop.f32.mrb[0].mxu0
      %v1682 = vadd.f32 %v1570, %v1681
      %v1683 = vpop.f32.mrb[0].mxu0
      %v1684 = vadd.f32 %v1570, %v1683
      %v1685 = vpop.f32.mrb[0].mxu0
      %v1686 = vadd.f32 %v1575, %v1685
      %v1687 = vpop.f32.mrb[0].mxu0
      %v1688 = vadd.f32 %v1575, %v1687
      %1689 = vmatprep.mubr.bf16.mxu0 0
      %1690 = vmatmul.mubr.bf16.gmra.mrb[0].mxu0 %v1002
      %v1691 = vpop.f32.mrb[0].mxu0
      %v1692 = vadd.f32 %v1580, %v1691
      %v1693 = vpop.f32.mrb[0].mxu0
      %v1694 = vadd.f32 %v1580, %v1693
      %v1695 = vpop.f32.mrb[0].mxu0
      %v1696 = vadd.f32 %v1585, %v1695
      %v1697 = vpop.f32.mrb[0].mxu0
      %v1698 = vadd.f32 %v1585, %v1697
      %1699 = vmatprep.mubr.bf16.mxu0 0
      %1700 = vmatmul.mubr.bf16.gmra.mrb[0].mxu0 %v1005
      %v1701 = vpop.f32.mrb[0].mxu0
      %v1702 = vadd.f32 %v1590, %v1701
      %v1703 = vpop.f32.mrb[0].mxu0
      %v1704 = vadd.f32 %v1590, %v1703
      %v1705 = vpop.f32.mrb[0].mxu0
      %v1706 = vadd.f32 %v1595, %v1705
      %v1707 = vpop.f32.mrb[0].mxu0
      %v1708 = vadd.f32 %v1595, %v1707
      %1709 = vdwg.mxu0
      %v1710 = vmax.f32 %v1632, 0.0
      %v1711 = vmax.f32 %v1634, 0.0
      %v1712 = vmax.f32 %v1636, 0.0
      %v1713 = vmax.f32 %v1638, 0.0
      %v1714 = vmax.f32 %v1642, 0.0
      %v1715 = vmax.f32 %v1644, 0.0
      %v1716 = vmax.f32 %v1646, 0.0
      %v1717 = vmax.f32 %v1648, 0.0
      %v1718 = vmax.f32 %v1652, 0.0
      %v1719 = vmax.f32 %v1654, 0.0
      %v1720 = vmax.f32 %v1656, 0.0
      %v1721 = vmax.f32 %v1658, 0.0
      %v1722 = vmax.f32 %v1662, 0.0
      %v1723 = vmax.f32 %v1664, 0.0
      %v1724 = vmax.f32 %v1666, 0.0
      %v1725 = vmax.f32 %v1668, 0.0
      %v1726 = vmax.f32 %v1672, 0.0
      %v1727 = vmax.f32 %v1674, 0.0
      %v1728 = vmax.f32 %v1676, 0.0
      %v1729 = vmax.f32 %v1678, 0.0
      %v1730 = vmax.f32 %v1682, 0.0
      %v1731 = vmax.f32 %v1684, 0.0
      %v1732 = vmax.f32 %v1686, 0.0
      %v1733 = vmax.f32 %v1688, 0.0
      %v1734 = vmax.f32 %v1692, 0.0
      %v1735 = vmax.f32 %v1694, 0.0
      %v1736 = vmax.f32 %v1696, 0.0
      %v1737 = vmax.f32 %v1698, 0.0
      %v1738 = vmax.f32 %v1702, 0.0
      %v1739 = vmax.f32 %v1704, 0.0
      %v1740 = vmax.f32 %v1706, 0.0
      %v1741 = vmax.f32 %v1708, 0.0
      %v1742 = vpack.c.bf16 %v1712, %v1710
      %v1743 = vpack.c.bf16 %v1713, %v1711
      %v1744 = vpack.c.bf16 %v1716, %v1714
      %v1745 = vpack.c.bf16 %v1717, %v1715
      %v1746 = vpack.c.bf16 %v1720, %v1718
      %v1747 = vpack.c.bf16 %v1721, %v1719
      %v1748 = vpack.c.bf16 %v1724, %v1722
      %v1749 = vpack.c.bf16 %v1725, %v1723
      %v1750 = vpack.c.bf16 %v1728, %v1726
      %v1751 = vpack.c.bf16 %v1729, %v1727
      %v1752 = vpack.c.bf16 %v1732, %v1730
      %v1753 = vpack.c.bf16 %v1733, %v1731
      %v1754 = vpack.c.bf16 %v1736, %v1734
      %v1755 = vpack.c.bf16 %v1737, %v1735
      %v1756 = vpack.c.bf16 %v1740, %v1738
      %v1757 = vpack.c.bf16 %v1741, %v1739
      %1758 = vmatprep.subr.bf16.mxu0 %v1743
      %1759 = vmatpush1.bf16.msra.mxu0 %v1742
      %1760 = vmatprep.subr.bf16.mxu0 %v1745
      %1761 = vmatpush1.bf16.msra.mxu0 %v1744
      %1762 = vmatprep.subr.bf16.mxu0 %v1747
      %1763 = vmatpush1.bf16.msra.mxu0 %v1746
      %1764 = vmatprep.subr.bf16.mxu0 %v1749
      %1765 = vmatpush1.bf16.msra.mxu0 %v1748
      %1766 = vmatprep.subr.bf16.mxu0 %v1751
      %1767 = vmatpush1.bf16.msra.mxu0 %v1750
      %1768 = vmatprep.subr.bf16.mxu0 %v1753
      %1769 = vmatpush1.bf16.msra.mxu0 %v1752
      %1770 = vmatprep.subr.bf16.mxu0 %v1755
      %1771 = vmatpush1.bf16.msra.mxu0 %v1754
      %1772 = vmatprep.subr.bf16.mxu0 %v1757
      %1773 = vmatpush1.bf16.msra.mxu0 %v1756
      %1774 = vmatprep.subr.bf16.mxu0 0
      %1775 = vmatpush1.bf16.msra.mxu0 0
      %1776 = vmatprep.subr.bf16.mxu0 0
      %1777 = vmatpush1.bf16.msra.mxu0 0
      %1778 = vmatprep.subr.bf16.mxu0 0
      %1779 = vmatpush1.bf16.msra.mxu0 0
      %1780 = vmatprep.subr.bf16.mxu0 0
      %1781 = vmatpush1.bf16.msra.mxu0 0
      %1782 = vmatprep.subr.bf16.mxu0 0
      %1783 = vmatpush1.bf16.msra.mxu0 0
      %1784 = vmatprep.subr.bf16.mxu0 0
      %1785 = vmatpush1.bf16.msra.mxu0 0
      %1786 = vmatprep.subr.bf16.mxu0 0
      %1787 = vmatpush1.bf16.msra.mxu0 0
      %1788 = vmatprep.subr.bf16.mxu0 0
      %1789 = vmatpush1.bf16.msra.mxu0 0
      %1790 = vmatprep.mubr.bf16.mxu0 0
      %1791 = vmatmul.mubr.bf16.gmra.mrb[0].mxu0 %v1196
      %v1792 = vpop.f32.mrb[0].mxu0
      %v1793 = vadd.f32 %v1171, %v1792
      %v1794 = vpop.f32.mrb[0].mxu0
      %v1795 = vadd.f32 %v1171, %v1794
      %v1796 = vpop.f32.mrb[0].mxu0
      %v1797 = vadd.f32 %v1176, %v1796
      %v1798 = vpop.f32.mrb[0].mxu0
      %v1799 = vadd.f32 %v1176, %v1798
      %1800 = vmatprep.mubr.bf16.mxu0 0
      %1801 = vmatmul.mubr.bf16.gmra.mrb[0].mxu0 %v1197
      %v1802 = vpop.f32.mrb[0].mxu0
      %v1803 = vadd.f32 %v1181, %v1802
      %v1804 = vpop.f32.mrb[0].mxu0
      %v1805 = vadd.f32 %v1181, %v1804
      %v1806 = vpop.f32.mrb[0].mxu0
      %v1807 = vadd.f32 %v1186, %v1806
      %v1808 = vpop.f32.mrb[0].mxu0
      %v1809 = vadd.f32 %v1186, %v1808
      %1810 = vdwg.mxu0
      %s1811 = scalar_lea.vmem %s364, 64
      %1812 = vst [vmem:[%s1811] sm:$0xff] %v1793
      %1813 = vst [vmem:[%s1811 + $0x8] sm:$0xff] %v1795
      %1814 = vst [vmem:[%s1811 + $0x10] sm:$0xff] %v1797
      %1815 = vst [vmem:[%s1811 + $0x18] sm:$0xff] %v1799
      %1816 = vst [vmem:[%s1811 + $0x20] sm:$0xff] %v1803
      %1817 = vst [vmem:[%s1811 + $0x28] sm:$0xff] %v1805
      %1818 = vst [vmem:[%s1811 + $0x30] sm:$0xff] %v1807
      %1819 = vst [vmem:[%s1811 + $0x38] sm:$0xff] %v1809
      %s1820 = scalar_lea.vmem %s350, 32
      %v1821 = vld [vmem:[%s1820] sm:$0xff]
      %v1822 = vld [vmem:[%s1820 + $0x8] sm:$0xff]
      %v1825 = vunpack.c.l.b16 %v1821
      %v1826 = vunpack.c.h.b16 %v1821
      %v1827 = vunpack.c.l.b16 %v1822
      %v1828 = vunpack.c.h.b16 %v1822
      %v1829 = vpack.c.b16 %v1827, %v1825
      %v1830 = vpack.c.b16 %v1828, %v1826
      %1833 = vmatprep.subr.bf16.mxu0 %v1830
      %1834 = vmatpush1.bf16.msra.mxu0 %v1829
      %1835 = vmatprep.subr.bf16.mxu0 0
      %1836 = vmatpush1.bf16.msra.mxu0 0
      %1837 = vmatprep.subr.bf16.mxu0 0
      %1838 = vmatpush1.bf16.msra.mxu0 0
      %1839 = vmatprep.subr.bf16.mxu0 0
      %1840 = vmatpush1.bf16.msra.mxu0 0
      %1841 = vmatprep.subr.bf16.mxu0 0
      %1842 = vmatpush1.bf16.msra.mxu0 0
      %1843 = vmatprep.subr.bf16.mxu0 0
      %1844 = vmatpush1.bf16.msra.mxu0 0
      %1845 = vmatprep.subr.bf16.mxu0 0
      %1846 = vmatpush1.bf16.msra.mxu0 0
      %1847 = vmatprep.subr.bf16.mxu0 0
      %1848 = vmatpush1.bf16.msra.mxu0 0
      %1849 = vmatprep.subr.bf16.mxu0 0
      %1850 = vmatpush1.bf16.msra.mxu0 0
      %1851 = vmatprep.subr.bf16.mxu0 0
      %1852 = vmatpush1.bf16.msra.mxu0 0
      %1853 = vmatprep.subr.bf16.mxu0 0
      %1854 = vmatpush1.bf16.msra.mxu0 0
      %1855 = vmatprep.subr.bf16.mxu0 0
      %1856 = vmatpush1.bf16.msra.mxu0 0
      %1857 = vmatprep.subr.bf16.mxu0 0
      %1858 = vmatpush1.bf16.msra.mxu0 0
      %1859 = vmatprep.subr.bf16.mxu0 0
      %1860 = vmatpush1.bf16.msra.mxu0 0
      %1861 = vmatprep.subr.bf16.mxu0 0
      %1862 = vmatpush1.bf16.msra.mxu0 0
      %1863 = vmatprep.subr.bf16.mxu0 0
      %1864 = vmatpush1.bf16.msra.mxu0 0
      %1865 = vmatprep.mubr.bf16.mxu0 0
      %1866 = vmatmul.mubr.bf16.gmra.mrb[0].mxu0 %v565
      %v1867 = vpop.f32.mrb[0].mxu0
      %v1868 = vadd.f32 %v436, %v1867
      %v1869 = vpop.f32.mrb[0].mxu0
      %v1870 = vadd.f32 %v436, %v1869
      %v1871 = vpop.f32.mrb[0].mxu0
      %v1872 = vadd.f32 %v441, %v1871
      %v1873 = vpop.f32.mrb[0].mxu0
      %v1874 = vadd.f32 %v441, %v1873
      %1875 = vmatprep.mubr.bf16.mxu0 0
      %1876 = vmatmul.mubr.bf16.gmra.mrb[0].mxu0 %v568
      %v1877 = vpop.f32.mrb[0].mxu0
      %v1878 = vadd.f32 %v446, %v1877
      %v1879 = vpop.f32.mrb[0].mxu0
      %v1880 = vadd.f32 %v446, %v1879
      %v1881 = vpop.f32.mrb[0].mxu0
      %v1882 = vadd.f32 %v451, %v1881
      %v1883 = vpop.f32.mrb[0].mxu0
      %v1884 = vadd.f32 %v451, %v1883
      %1885 = vmatprep.mubr.bf16.mxu0 0
      %1886 = vmatmul.mubr.bf16.gmra.mrb[0].mxu0 %v571
      %v1887 = vpop.f32.mrb[0].mxu0
      %v1888 = vadd.f32 %v456, %v1887
      %v1889 = vpop.f32.mrb[0].mxu0
      %v1890 = vadd.f32 %v456, %v1889
      %v1891 = vpop.f32.mrb[0].mxu0
      %v1892 = vadd.f32 %v461, %v1891
      %v1893 = vpop.f32.mrb[0].mxu0
      %v1894 = vadd.f32 %v461, %v1893
      %1895 = vmatprep.mubr.bf16.mxu0 0
      %1896 = vmatmul.mubr.bf16.gmra.mrb[0].mxu0 %v574
      %v1897 = vpop.f32.mrb[0].mxu0
      %v1898 = vadd.f32 %v466, %v1897
      %v1899 = vpop.f32.mrb[0].mxu0
      %v1900 = vadd.f32 %v466, %v1899
      %v1901 = vpop.f32.mrb[0].mxu0
      %v1902 = vadd.f32 %v471, %v1901
      %v1903 = vpop.f32.mrb[0].mxu0
      %v1904 = vadd.f32 %v471, %v1903
      %1905 = vmatprep.mubr.bf16.mxu0 0
      %1906 = vmatmul.mubr.bf16.gmra.mrb[0].mxu0 %v577
      %v1907 = vpop.f32.mrb[0].mxu0
      %v1908 = vadd.f32 %v476, %v1907
      %v1909 = vpop.f32.mrb[0].mxu0
      %v1910 = vadd.f32 %v476, %v1909
      %v1911 = vpop.f32.mrb[0].mxu0
      %v1912 = vadd.f32 %v481, %v1911
      %v1913 = vpop.f32.mrb[0].mxu0
      %v1914 = vadd.f32 %v481, %v1913
      %1915 = vmatprep.mubr.bf16.mxu0 0
      %1916 = vmatmul.mubr.bf16.gmra.mrb[0].mxu0 %v580
      %v1917 = vpop.f32.mrb[0].mxu0
      %v1918 = vadd.f32 %v486, %v1917
      %v1919 = vpop.f32.mrb[0].mxu0
      %v1920 = vadd.f32 %v486, %v1919
      %v1921 = vpop.f32.mrb[0].mxu0
      %v1922 = vadd.f32 %v491, %v1921
      %v1923 = vpop.f32.mrb[0].mxu0
      %v1924 = vadd.f32 %v491, %v1923
      %1925 = vmatprep.mubr.bf16.mxu0 0
      %1926 = vmatmul.mubr.bf16.gmra.mrb[0].mxu0 %v583
      %v1927 = vpop.f32.mrb[0].mxu0
      %v1928 = vadd.f32 %v496, %v1927
      %v1929 = vpop.f32.mrb[0].mxu0
      %v1930 = vadd.f32 %v496, %v1929
      %v1931 = vpop.f32.mrb[0].mxu0
      %v1932 = vadd.f32 %v501, %v1931
      %v1933 = vpop.f32.mrb[0].mxu0
      %v1934 = vadd.f32 %v501, %v1933
      %1935 = vmatprep.mubr.bf16.mxu0 0
      %1936 = vmatmul.mubr.bf16.gmra.mrb[0].mxu0 %v586
      %v1937 = vpop.f32.mrb[0].mxu0
      %v1938 = vadd.f32 %v506, %v1937
      %v1939 = vpop.f32.mrb[0].mxu0
      %v1940 = vadd.f32 %v506, %v1939
      %v1941 = vpop.f32.mrb[0].mxu0
      %v1942 = vadd.f32 %v511, %v1941
      %v1943 = vpop.f32.mrb[0].mxu0
      %v1944 = vadd.f32 %v511, %v1943
      %1945 = vdwg.mxu0
      %v1946 = vmax.f32 %v1868, 0.0
      %v1947 = vmax.f32 %v1870, 0.0
      %v1948 = vmax.f32 %v1872, 0.0
      %v1949 = vmax.f32 %v1874, 0.0
      %v1950 = vmax.f32 %v1878, 0.0
      %v1951 = vmax.f32 %v1880, 0.0
      %v1952 = vmax.f32 %v1882, 0.0
      %v1953 = vmax.f32 %v1884, 0.0
      %v1954 = vmax.f32 %v1888, 0.0
      %v1955 = vmax.f32 %v1890, 0.0
      %v1956 = vmax.f32 %v1892, 0.0
      %v1957 = vmax.f32 %v1894, 0.0
      %v1958 = vmax.f32 %v1898, 0.0
      %v1959 = vmax.f32 %v1900, 0.0
      %v1960 = vmax.f32 %v1902, 0.0
      %v1961 = vmax.f32 %v1904, 0.0
      %v1962 = vmax.f32 %v1908, 0.0
      %v1963 = vmax.f32 %v1910, 0.0
      %v1964 = vmax.f32 %v1912, 0.0
      %v1965 = vmax.f32 %v1914, 0.0
      %v1966 = vmax.f32 %v1918, 0.0
      %v1967 = vmax.f32 %v1920, 0.0
      %v1968 = vmax.f32 %v1922, 0.0
      %v1969 = vmax.f32 %v1924, 0.0
      %v1970 = vmax.f32 %v1928, 0.0
      %v1971 = vmax.f32 %v1930, 0.0
      %v1972 = vmax.f32 %v1932, 0.0
      %v1973 = vmax.f32 %v1934, 0.0
      %v1974 = vmax.f32 %v1938, 0.0
      %v1975 = vmax.f32 %v1940, 0.0
      %v1976 = vmax.f32 %v1942, 0.0
      %v1977 = vmax.f32 %v1944, 0.0
      %v1978 = vpack.c.bf16 %v1948, %v1946
      %v1979 = vpack.c.bf16 %v1949, %v1947
      %v1980 = vpack.c.bf16 %v1952, %v1950
      %v1981 = vpack.c.bf16 %v1953, %v1951
      %v1982 = vpack.c.bf16 %v1956, %v1954
      %v1983 = vpack.c.bf16 %v1957, %v1955
      %v1984 = vpack.c.bf16 %v1960, %v1958
      %v1985 = vpack.c.bf16 %v1961, %v1959
      %v1986 = vpack.c.bf16 %v1964, %v1962
      %v1987 = vpack.c.bf16 %v1965, %v1963
      %v1988 = vpack.c.bf16 %v1968, %v1966
      %v1989 = vpack.c.bf16 %v1969, %v1967
      %v1990 = vpack.c.bf16 %v1972, %v1970
      %v1991 = vpack.c.bf16 %v1973, %v1971
      %v1992 = vpack.c.bf16 %v1976, %v1974
      %v1993 = vpack.c.bf16 %v1977, %v1975
      %1994 = vmatprep.subr.bf16.mxu0 %v1979
      %1995 = vmatpush1.bf16.msra.mxu0 %v1978
      %1996 = vmatprep.subr.bf16.mxu0 %v1981
      %1997 = vmatpush1.bf16.msra.mxu0 %v1980
      %1998 = vmatprep.subr.bf16.mxu0 %v1983
      %1999 = vmatpush1.bf16.msra.mxu0 %v1982
      %2000 = vmatprep.subr.bf16.mxu0 %v1985
      %2001 = vmatpush1.bf16.msra.mxu0 %v1984
      %2002 = vmatprep.subr.bf16.mxu0 %v1987
      %2003 = vmatpush1.bf16.msra.mxu0 %v1986
      %2004 = vmatprep.subr.bf16.mxu0 %v1989
      %2005 = vmatpush1.bf16.msra.mxu0 %v1988
      %2006 = vmatprep.subr.bf16.mxu0 %v1991
      %2007 = vmatpush1.bf16.msra.mxu0 %v1990
      %2008 = vmatprep.subr.bf16.mxu0 %v1993
      %2009 = vmatpush1.bf16.msra.mxu0 %v1992
      %2010 = vmatprep.subr.bf16.mxu0 0
      %2011 = vmatpush1.bf16.msra.mxu0 0
      %2012 = vmatprep.subr.bf16.mxu0 0
      %2013 = vmatpush1.bf16.msra.mxu0 0
      %2014 = vmatprep.subr.bf16.mxu0 0
      %2015 = vmatpush1.bf16.msra.mxu0 0
      %2016 = vmatprep.subr.bf16.mxu0 0
      %2017 = vmatpush1.bf16.msra.mxu0 0
      %2018 = vmatprep.subr.bf16.mxu0 0
      %2019 = vmatpush1.bf16.msra.mxu0 0
      %2020 = vmatprep.subr.bf16.mxu0 0
      %2021 = vmatpush1.bf16.msra.mxu0 0
      %2022 = vmatprep.subr.bf16.mxu0 0
      %2023 = vmatpush1.bf16.msra.mxu0 0
      %2024 = vmatprep.subr.bf16.mxu0 0
      %2025 = vmatpush1.bf16.msra.mxu0 0
      %2026 = vmatprep.mubr.bf16.mxu0 0
      %2027 = vmatmul.mubr.bf16.gmra.mrb[0].mxu0 %v777
      %v2028 = vpop.f32.mrb[0].mxu0
      %v2029 = vadd.f32 %v752, %v2028
      %v2030 = vpop.f32.mrb[0].mxu0
      %v2031 = vadd.f32 %v752, %v2030
      %v2032 = vpop.f32.mrb[0].mxu0
      %v2033 = vadd.f32 %v757, %v2032
      %v2034 = vpop.f32.mrb[0].mxu0
      %v2035 = vadd.f32 %v757, %v2034
      %2036 = vmatprep.mubr.bf16.mxu0 0
      %2037 = vmatmul.mubr.bf16.gmra.mrb[0].mxu0 %v778
      %v2038 = vpop.f32.mrb[0].mxu0
      %v2039 = vadd.f32 %v762, %v2038
      %v2040 = vpop.f32.mrb[0].mxu0
      %v2041 = vadd.f32 %v762, %v2040
      %v2042 = vpop.f32.mrb[0].mxu0
      %v2043 = vadd.f32 %v767, %v2042
      %v2044 = vpop.f32.mrb[0].mxu0
      %v2045 = vadd.f32 %v767, %v2044
      %2046 = vdwg.mxu0
      %v2047 = vmax.f32 %v2029, 0.0
      %v2048 = vmax.f32 %v2031, 0.0
      %v2049 = vmax.f32 %v2033, 0.0
      %v2050 = vmax.f32 %v2035, 0.0
      %v2051 = vmax.f32 %v2039, 0.0
      %v2052 = vmax.f32 %v2041, 0.0
      %v2053 = vmax.f32 %v2043, 0.0
      %v2054 = vmax.f32 %v2045, 0.0
      %v2055 = vpack.c.bf16 %v2049, %v2047
      %v2056 = vpack.c.bf16 %v2050, %v2048
      %v2057 = vpack.c.bf16 %v2053, %v2051
      %v2058 = vpack.c.bf16 %v2054, %v2052
      %s2059 = scalar_lea.vmem %s357, 256
      %v2060 = vld [vmem:[%s2059] sm:$0xff]
      %v2061 = vld [vmem:[%s2059 + $0x8] sm:$0xff]
      %v2062 = vld [vmem:[%s2059 + $0x10] sm:$0xff]
      %v2063 = vld [vmem:[%s2059 + $0x18] sm:$0xff]
      %v2064 = vld [vmem:[%s2059 + $0x20] sm:$0xff]
      %v2065 = vld [vmem:[%s2059 + $0x28] sm:$0xff]
      %v2066 = vld [vmem:[%s2059 + $0x30] sm:$0xff]
      %v2067 = vld [vmem:[%s2059 + $0x38] sm:$0xff]
      %v2068 = vld [vmem:[%s2059 + $0x40] sm:$0xff]
      %v2069 = vld [vmem:[%s2059 + $0x48] sm:$0xff]
      %v2070 = vld [vmem:[%s2059 + $0x50] sm:$0xff]
      %v2071 = vld [vmem:[%s2059 + $0x58] sm:$0xff]
      %v2072 = vld [vmem:[%s2059 + $0x60] sm:$0xff]
      %v2073 = vld [vmem:[%s2059 + $0x68] sm:$0xff]
      %v2074 = vld [vmem:[%s2059 + $0x70] sm:$0xff]
      %v2075 = vld [vmem:[%s2059 + $0x78] sm:$0xff]
      %2077 = vset.pattern.permute.xlu0 0
      %2078 = vperm.xlu0 %2077, %v2060
      %v2079 = vpop.permute.xlu0 %2078
      %2082 = vset.pattern.permute.xlu0 0
      %2083 = vperm.xlu0 %2082, %v2061
      %v2084 = vpop.permute.xlu0 %2083
      %2087 = vset.pattern.permute.xlu0 0
      %2088 = vperm.xlu0 %2087, %v2062
      %v2089 = vpop.permute.xlu0 %2088
      %2092 = vset.pattern.permute.xlu0 0
      %2093 = vperm.xlu0 %2092, %v2063
      %v2094 = vpop.permute.xlu0 %2093
      %2097 = vset.pattern.permute.xlu0 0
      %2098 = vperm.xlu0 %2097, %v2064
      %v2099 = vpop.permute.xlu0 %2098
      %2102 = vset.pattern.permute.xlu0 0
      %2103 = vperm.xlu0 %2102, %v2065
      %v2104 = vpop.permute.xlu0 %2103
      %2107 = vset.pattern.permute.xlu0 0
      %2108 = vperm.xlu0 %2107, %v2066
      %v2109 = vpop.permute.xlu0 %2108
      %2112 = vset.pattern.permute.xlu0 0
      %2113 = vperm.xlu0 %2112, %v2067
      %v2114 = vpop.permute.xlu0 %2113
      %2117 = vset.pattern.permute.xlu0 0
      %2118 = vperm.xlu0 %2117, %v2068
      %v2119 = vpop.permute.xlu0 %2118
      %2122 = vset.pattern.permute.xlu0 0
      %2123 = vperm.xlu0 %2122, %v2069
      %v2124 = vpop.permute.xlu0 %2123
      %2127 = vset.pattern.permute.xlu0 0
      %2128 = vperm.xlu0 %2127, %v2070
      %v2129 = vpop.permute.xlu0 %2128
      %2132 = vset.pattern.permute.xlu0 0
      %2133 = vperm.xlu0 %2132, %v2071
      %v2134 = vpop.permute.xlu0 %2133
      %2137 = vset.pattern.permute.xlu0 0
      %2138 = vperm.xlu0 %2137, %v2072
      %v2139 = vpop.permute.xlu0 %2138
      %2142 = vset.pattern.permute.xlu0 0
      %2143 = vperm.xlu0 %2142, %v2073
      %v2144 = vpop.permute.xlu0 %2143
      %2147 = vset.pattern.permute.xlu0 0
      %2148 = vperm.xlu0 %2147, %v2074
      %v2149 = vpop.permute.xlu0 %2148
      %2152 = vset.pattern.permute.xlu0 0
      %2153 = vperm.xlu0 %2152, %v2075
      %v2154 = vpop.permute.xlu0 %2153
      %2156 = vmatprep.subr.bf16.mxu0 %v2056
      %2157 = vmatpush1.bf16.msra.mxu0 %v2055
      %2158 = vmatprep.subr.bf16.mxu0 %v2058
      %2159 = vmatpush1.bf16.msra.mxu0 %v2057
      %2160 = vmatprep.subr.bf16.mxu0 0
      %2161 = vmatpush1.bf16.msra.mxu0 0
      %2162 = vmatprep.subr.bf16.mxu0 0
      %2163 = vmatpush1.bf16.msra.mxu0 0
      %2164 = vmatprep.subr.bf16.mxu0 0
      %2165 = vmatpush1.bf16.msra.mxu0 0
      %2166 = vmatprep.subr.bf16.mxu0 0
      %2167 = vmatpush1.bf16.msra.mxu0 0
      %2168 = vmatprep.subr.bf16.mxu0 0
      %2169 = vmatpush1.bf16.msra.mxu0 0
      %2170 = vmatprep.subr.bf16.mxu0 0
      %2171 = vmatpush1.bf16.msra.mxu0 0
      %2172 = vmatprep.subr.bf16.mxu0 0
      %2173 = vmatpush1.bf16.msra.mxu0 0
      %2174 = vmatprep.subr.bf16.mxu0 0
      %2175 = vmatpush1.bf16.msra.mxu0 0
      %2176 = vmatprep.subr.bf16.mxu0 0
      %2177 = vmatpush1.bf16.msra.mxu0 0
      %2178 = vmatprep.subr.bf16.mxu0 0
      %2179 = vmatpush1.bf16.msra.mxu0 0
      %2180 = vmatprep.subr.bf16.mxu0 0
      %2181 = vmatpush1.bf16.msra.mxu0 0
      %2182 = vmatprep.subr.bf16.mxu0 0
      %2183 = vmatpush1.bf16.msra.mxu0 0
      %2184 = vmatprep.subr.bf16.mxu0 0
      %2185 = vmatpush1.bf16.msra.mxu0 0
      %2186 = vmatprep.subr.bf16.mxu0 0
      %2187 = vmatpush1.bf16.msra.mxu0 0
      %2188 = vmatprep.mubr.bf16.mxu0 0
      %2189 = vmatmul.mubr.bf16.gmra.mrb[0].mxu0 %v984
      %v2190 = vpop.f32.mrb[0].mxu0
      %v2191 = vadd.f32 %v2079, %v2190
      %v2192 = vpop.f32.mrb[0].mxu0
      %v2193 = vadd.f32 %v2079, %v2192
      %v2194 = vpop.f32.mrb[0].mxu0
      %v2195 = vadd.f32 %v2084, %v2194
      %v2196 = vpop.f32.mrb[0].mxu0
      %v2197 = vadd.f32 %v2084, %v2196
      %2198 = vmatprep.mubr.bf16.mxu0 0
      %2199 = vmatmul.mubr.bf16.gmra.mrb[0].mxu0 %v987
      %v2200 = vpop.f32.mrb[0].mxu0
      %v2201 = vadd.f32 %v2089, %v2200
      %v2202 = vpop.f32.mrb[0].mxu0
      %v2203 = vadd.f32 %v2089, %v2202
      %v2204 = vpop.f32.mrb[0].mxu0
      %v2205 = vadd.f32 %v2094, %v2204
      %v2206 = vpop.f32.mrb[0].mxu0
      %v2207 = vadd.f32 %v2094, %v2206
      %2208 = vmatprep.mubr.bf16.mxu0 0
      %2209 = vmatmul.mubr.bf16.gmra.mrb[0].mxu0 %v990
      %v2210 = vpop.f32.mrb[0].mxu0
      %v2211 = vadd.f32 %v2099, %v2210
      %v2212 = vpop.f32.mrb[0].mxu0
      %v2213 = vadd.f32 %v2099, %v2212
      %v2214 = vpop.f32.mrb[0].mxu0
      %v2215 = vadd.f32 %v2104, %v2214
      %v2216 = vpop.f32.mrb[0].mxu0
      %v2217 = vadd.f32 %v2104, %v2216
      %2218 = vmatprep.mubr.bf16.mxu0 0
      %2219 = vmatmul.mubr.bf16.gmra.mrb[0].mxu0 %v993
      %v2220 = vpop.f32.mrb[0].mxu0
      %v2221 = vadd.f32 %v2109, %v2220
      %v2222 = vpop.f32.mrb[0].mxu0
      %v2223 = vadd.f32 %v2109, %v2222
      %v2224 = vpop.f32.mrb[0].mxu0
      %v2225 = vadd.f32 %v2114, %v2224
      %v2226 = vpop.f32.mrb[0].mxu0
      %v2227 = vadd.f32 %v2114, %v2226
      %2228 = vmatprep.mubr.bf16.mxu0 0
      %2229 = vmatmul.mubr.bf16.gmra.mrb[0].mxu0 %v996
      %v2230 = vpop.f32.mrb[0].mxu0
      %v2231 = vadd.f32 %v2119, %v2230
      %v2232 = vpop.f32.mrb[0].mxu0
      %v2233 = vadd.f32 %v2119, %v2232
      %v2234 = vpop.f32.mrb[0].mxu0
      %v2235 = vadd.f32 %v2124, %v2234
      %v2236 = vpop.f32.mrb[0].mxu0
      %v2237 = vadd.f32 %v2124, %v2236
      %2238 = vmatprep.mubr.bf16.mxu0 0
      %2239 = vmatmul.mubr.bf16.gmra.mrb[0].mxu0 %v999
      %v2240 = vpop.f32.mrb[0].mxu0
      %v2241 = vadd.f32 %v2129, %v2240
      %v2242 = vpop.f32.mrb[0].mxu0
      %v2243 = vadd.f32 %v2129, %v2242
      %v2244 = vpop.f32.mrb[0].mxu0
      %v2245 = vadd.f32 %v2134, %v2244
      %v2246 = vpop.f32.mrb[0].mxu0
      %v2247 = vadd.f32 %v2134, %v2246
      %2248 = vmatprep.mubr.bf16.mxu0 0
      %2249 = vmatmul.mubr.bf16.gmra.mrb[0].mxu0 %v1002
      %v2250 = vpop.f32.mrb[0].mxu0
      %v2251 = vadd.f32 %v2139, %v2250
      %v2252 = vpop.f32.mrb[0].mxu0
      %v2253 = vadd.f32 %v2139, %v2252
      %v2254 = vpop.f32.mrb[0].mxu0
      %v2255 = vadd.f32 %v2144, %v2254
      %v2256 = vpop.f32.mrb[0].mxu0
      %v2257 = vadd.f32 %v2144, %v2256
      %2258 = vmatprep.mubr.bf16.mxu0 0
      %2259 = vmatmul.mubr.bf16.gmra.mrb[0].mxu0 %v1005
      %v2260 = vpop.f32.mrb[0].mxu0
      %v2261 = vadd.f32 %v2149, %v2260
      %v2262 = vpop.f32.mrb[0].mxu0
      %v2263 = vadd.f32 %v2149, %v2262
      %v2264 = vpop.f32.mrb[0].mxu0
      %v2265 = vadd.f32 %v2154, %v2264
      %v2266 = vpop.f32.mrb[0].mxu0
      %v2267 = vadd.f32 %v2154, %v2266
      %2268 = vdwg.mxu0
      %v2269 = vmax.f32 %v2191, 0.0
      %v2270 = vmax.f32 %v2193, 0.0
      %v2271 = vmax.f32 %v2195, 0.0
      %v2272 = vmax.f32 %v2197, 0.0
      %v2273 = vmax.f32 %v2201, 0.0
      %v2274 = vmax.f32 %v2203, 0.0
      %v2275 = vmax.f32 %v2205, 0.0
      %v2276 = vmax.f32 %v2207, 0.0
      %v2277 = vmax.f32 %v2211, 0.0
      %v2278 = vmax.f32 %v2213, 0.0
      %v2279 = vmax.f32 %v2215, 0.0
      %v2280 = vmax.f32 %v2217, 0.0
      %v2281 = vmax.f32 %v2221, 0.0
      %v2282 = vmax.f32 %v2223, 0.0
      %v2283 = vmax.f32 %v2225, 0.0
      %v2284 = vmax.f32 %v2227, 0.0
      %v2285 = vmax.f32 %v2231, 0.0
      %v2286 = vmax.f32 %v2233, 0.0
      %v2287 = vmax.f32 %v2235, 0.0
      %v2288 = vmax.f32 %v2237, 0.0
      %v2289 = vmax.f32 %v2241, 0.0
      %v2290 = vmax.f32 %v2243, 0.0
      %v2291 = vmax.f32 %v2245, 0.0
      %v2292 = vmax.f32 %v2247, 0.0
      %v2293 = vmax.f32 %v2251, 0.0
      %v2294 = vmax.f32 %v2253, 0.0
      %v2295 = vmax.f32 %v2255, 0.0
      %v2296 = vmax.f32 %v2257, 0.0
      %v2297 = vmax.f32 %v2261, 0.0
      %v2298 = vmax.f32 %v2263, 0.0
      %v2299 = vmax.f32 %v2265, 0.0
      %v2300 = vmax.f32 %v2267, 0.0
      %v2301 = vpack.c.bf16 %v2271, %v2269
      %v2302 = vpack.c.bf16 %v2272, %v2270
      %v2303 = vpack.c.bf16 %v2275, %v2273
      %v2304 = vpack.c.bf16 %v2276, %v2274
      %v2305 = vpack.c.bf16 %v2279, %v2277
      %v2306 = vpack.c.bf16 %v2280, %v2278
      %v2307 = vpack.c.bf16 %v2283, %v2281
      %v2308 = vpack.c.bf16 %v2284, %v2282
      %v2309 = vpack.c.bf16 %v2287, %v2285
      %v2310 = vpack.c.bf16 %v2288, %v2286
      %v2311 = vpack.c.bf16 %v2291, %v2289
      %v2312 = vpack.c.bf16 %v2292, %v2290
      %v2313 = vpack.c.bf16 %v2295, %v2293
      %v2314 = vpack.c.bf16 %v2296, %v2294
      %v2315 = vpack.c.bf16 %v2299, %v2297
      %v2316 = vpack.c.bf16 %v2300, %v2298
      %2317 = vmatprep.subr.bf16.mxu0 %v2302
      %2318 = vmatpush1.bf16.msra.mxu0 %v2301
      %2319 = vmatprep.subr.bf16.mxu0 %v2304
      %2320 = vmatpush1.bf16.msra.mxu0 %v2303
      %2321 = vmatprep.subr.bf16.mxu0 %v2306
      %2322 = vmatpush1.bf16.msra.mxu0 %v2305
      %2323 = vmatprep.subr.bf16.mxu0 %v2308
      %2324 = vmatpush1.bf16.msra.mxu0 %v2307
      %2325 = vmatprep.subr.bf16.mxu0 %v2310
      %2326 = vmatpush1.bf16.msra.mxu0 %v2309
      %2327 = vmatprep.subr.bf16.mxu0 %v2312
      %2328 = vmatpush1.bf16.msra.mxu0 %v2311
      %2329 = vmatprep.subr.bf16.mxu0 %v2314
      %2330 = vmatpush1.bf16.msra.mxu0 %v2313
      %2331 = vmatprep.subr.bf16.mxu0 %v2316
      %2332 = vmatpush1.bf16.msra.mxu0 %v2315
      %2333 = vmatprep.subr.bf16.mxu0 0
      %2334 = vmatpush1.bf16.msra.mxu0 0
      %2335 = vmatprep.subr.bf16.mxu0 0
      %2336 = vmatpush1.bf16.msra.mxu0 0
      %2337 = vmatprep.subr.bf16.mxu0 0
      %2338 = vmatpush1.bf16.msra.mxu0 0
      %2339 = vmatprep.subr.bf16.mxu0 0
      %2340 = vmatpush1.bf16.msra.mxu0 0
      %2341 = vmatprep.subr.bf16.mxu0 0
      %2342 = vmatpush1.bf16.msra.mxu0 0
      %2343 = vmatprep.subr.bf16.mxu0 0
      %2344 = vmatpush1.bf16.msra.mxu0 0
      %2345 = vmatprep.subr.bf16.mxu0 0
      %2346 = vmatpush1.bf16.msra.mxu0 0
      %2347 = vmatprep.subr.bf16.mxu0 0
      %2348 = vmatpush1.bf16.msra.mxu0 0
      %2349 = vmatprep.mubr.bf16.mxu0 0
      %2350 = vmatmul.mubr.bf16.gmra.mrb[0].mxu0 %v1196
      %v2351 = vpop.f32.mrb[0].mxu0
      %v2352 = vadd.f32 %v1171, %v2351
      %v2353 = vpop.f32.mrb[0].mxu0
      %v2354 = vadd.f32 %v1171, %v2353
      %v2355 = vpop.f32.mrb[0].mxu0
      %v2356 = vadd.f32 %v1176, %v2355
      %v2357 = vpop.f32.mrb[0].mxu0
      %v2358 = vadd.f32 %v1176, %v2357
      %2359 = vmatprep.mubr.bf16.mxu0 0
      %2360 = vmatmul.mubr.bf16.gmra.mrb[0].mxu0 %v1197
      %v2361 = vpop.f32.mrb[0].mxu0
      %v2362 = vadd.f32 %v1181, %v2361
      %v2363 = vpop.f32.mrb[0].mxu0
      %v2364 = vadd.f32 %v1181, %v2363
      %v2365 = vpop.f32.mrb[0].mxu0
      %v2366 = vadd.f32 %v1186, %v2365
      %v2367 = vpop.f32.mrb[0].mxu0
      %v2368 = vadd.f32 %v1186, %v2367
      %2369 = vdwg.mxu0
      %s2370 = scalar_lea.vmem %s364, 128
      %2371 = vst [vmem:[%s2370] sm:$0xff] %v2352
      %2372 = vst [vmem:[%s2370 + $0x8] sm:$0xff] %v2354
      %2373 = vst [vmem:[%s2370 + $0x10] sm:$0xff] %v2356
      %2374 = vst [vmem:[%s2370 + $0x18] sm:$0xff] %v2358
      %2375 = vst [vmem:[%s2370 + $0x20] sm:$0xff] %v2362
      %2376 = vst [vmem:[%s2370 + $0x28] sm:$0xff] %v2364
      %2377 = vst [vmem:[%s2370 + $0x30] sm:$0xff] %v2366
      %2378 = vst [vmem:[%s2370 + $0x38] sm:$0xff] %v2368
      %s2379 = smul.u32 3, %s20
      %p2380 = scmp.lt.s32.totalorder %s2379, 5
      %s2381 = scalar_select %p2380, %s2379, 5
      %s2382 = smul.addr %s2381, 8
      %s2383 = smul.addr %s2382, 8
      %s2384 = scalar_lea.vmem %s9, %s2383
      // Predicated region
      $region57: #{resnet_tensor_goal_encoder_forward.1} parent=55 // pred_check
        %p2385 = pneg %p237
      $region58: #{resnet_tensor_goal_encoder_forward.1} parent=55 // pred_check_branch
        %2387 = sbr.rel (%p2385) target = $region60
      $region59: #{resnet_tensor_goal_encoder_forward.1} parent=55 // pred_region
        %s2388 = smul.u32 3, %s20
      $region60: #{resnet_tensor_goal_encoder_forward.1} parent=55 // pred_fallthru
        _
    $region56: #{resnet_tensor_goal_encoder_forward.1} parent=5 // pred_fallthru
      _
    %p2389 = scmp.le.s32.totalorder 2, %s15
    // Predicated region
    $region61: #{resnet_tensor_goal_encoder_forward.1} parent=5 // pred_check
      %p2390 = pneg %p2389
    $region62: #{resnet_tensor_goal_encoder_forward.1} parent=5 // pred_check_branch
      %2392 = sbr.rel (%p2390) target = $region64
    $region63: #{resnet_tensor_goal_encoder_forward.1} parent=5 // pred_region
      %s2393 = ssub.s32 %s15, 2
      // Predicated region
      $region65: #{resnet_tensor_goal_encoder_forward.1} parent=63 // pred_check
        %p2394 = pneg %p243
      $region66: #{resnet_tensor_goal_encoder_forward.1} parent=63 // pred_check_branch
        %2396 = sbr.rel (%p2394) target = $region68
      $region67: #{resnet_tensor_goal_encoder_forward.1} parent=63 // pred_region
        %s2397 = smul.u32 3, %s21
        %p2398 = scmp.lt.s32.totalorder %s2397, 5
        %s2399 = scalar_select %p2398, %s2397, 5
        %s2400 = smul.addr %s2399, 8
        %s2401 = smul.addr %s2400, 8
        %s2402 = scalar_lea.vmem %s9, %s2401
      $region68: #{resnet_tensor_goal_encoder_forward.1} parent=63 // pred_fallthru
        _
    $region64: #{resnet_tensor_goal_encoder_forward.1} parent=5 // pred_fallthru
      _
  $region6: #{resnet_tensor_goal_encoder_forward.1} parent=0 // loop_footer
    %s19 = sadd.s32 1, %s15
  $region7: #{resnet_tensor_goal_encoder_forward.1} parent=0 // loop_footer_branch
    %14 = sbr.rel target = $region3
  $region8: #{resnet_tensor_goal_encoder_forward.1} parent=0 // loop_exit
    _

</llo_original>
